<compile_context>
chip_gen: v7x
topology: tpu7x:2x2x1
jax: 0.10.0
libtpu: 0.0.40
codegen_flags: <defaults>
</compile_context>

<pallas_src>
import jax
import jax.numpy as jnp
from jax import lax
from jax.experimental import pallas as pl
from jax.experimental.pallas import tpu as pltpu


def _round_up(a: int, m: int) -> int:
    return ((a + m - 1) // m) * m


def _make_kernel(tile_m: int, n_valid_rows: int, inv_n1: float, inv_n2: float,
                 need_row_mask: bool):
    """Builds the fused MLP+stats kernel with trace-time constants baked in."""

    def kernel(x_ref, w_ref, b_ref, out_ref, avg_ref, acc_ref):
        i = pl.program_id(0)

        # Init the running |preact| sums (SMEM scratch persists across steps).
        @pl.when(i == 0)
        def _init():
            acc_ref[0] = jnp.float32(0.0)
            acc_ref[1] = jnp.float32(0.0)

        x = x_ref[...]                       # (tile_m, D) f32
        b = b_ref[...]                       # (3, D) f32
        b1 = b[0:1, :]
        b2 = b[1:2, :]
        b3 = b[2:3, :]

        if need_row_mask:
            rows = i * tile_m + lax.broadcasted_iota(jnp.int32, (tile_m, 1), 0)
            valid = (rows < n_valid_rows).astype(jnp.float32)   # (tile_m, 1)
        else:
            valid = None

        def masked_abs_sum(p):
            a = jnp.abs(p)
            if valid is not None:
                a = a * valid                # zero-padded rows contribute 0
            return jnp.sum(a)

        # Layer 1: Linear -> ReluWithStats
        pre1 = jnp.dot(x, w_ref[0], preferred_element_type=jnp.float32) + b1
        s1 = masked_abs_sum(pre1)
        h1 = jnp.maximum(pre1, 0.0)

        # Layer 2: Linear -> ReluWithStats
        pre2 = jnp.dot(h1, w_ref[1], preferred_element_type=jnp.float32) + b2
        s2 = masked_abs_sum(pre2)
        h2 = jnp.maximum(pre2, 0.0)

        # Layer 3: Linear (no stats); output tile is lane-dense (D mult of 128)
        out_ref[...] = jnp.dot(h2, w_ref[2],
                               preferred_element_type=jnp.float32) + b3

        # Accumulate running sums across grid steps.
        acc_ref[0] = acc_ref[0] + s1
        acc_ref[1] = acc_ref[1] + s2

        # Finalize: normalize by GLOBAL (unpadded) element counts on last step.
        @pl.when(i == pl.num_programs(0) - 1)
        def _finalize():
            avg_ref[0] = (acc_ref[0] * inv_n1 + acc_ref[1] * inv_n2) * 0.5

    return kernel


def module_with_stats_forward(x, params, tile_m=256):
    """Forward pass of ModuleWithStats, fully fused in one pallas_call.

    params: [(w1,b1,True), (w2,b2,True), (w3,b3,False)] matching the module.
    Returns (out, avg_preact).
    """
    (w1, b1, r1), (w2, b2, r2), (w3, b3, r3) = params
    assert (r1, r2, r3) == (True, True, False), \
        "kernel is specialized to Linear->ReluWithStats x2 -> Linear"

    f32 = jnp.float32
    B, D0 = x.shape
    D1, D2, D3 = w1.shape[1], w2.shape[1], w3.shape[1]

    # Pad every feature dim to a common lane-dense width (multiple of 128).
    D = _round_up(max(D0, D1, D2, D3), 128)

    # Row tiling: MXU-full tiles, padded batch, masked stats for padded rows.
    tm = min(tile_m, _round_up(B, 8))
    B_pad = _round_up(B, tm)
    grid = B_pad // tm
    need_row_mask = B_pad != B

    # Pack inputs (zero padding keeps the math exact: padded cols/rows of the
    # weights are zero, so they add nothing to activations or stats).
    x_p = jnp.zeros((B_pad, D), f32).at[:B, :D0].set(x.astype(f32))
    w_p = (jnp.zeros((3, D, D), f32)
           .at[0, :D0, :D1].set(w1.astype(f32))
           .at[1, :D1, :D2].set(w2.astype(f32))
           .at[2, :D2, :D3].set(w3.astype(f32)))
    b_p = (jnp.zeros((3, D), f32)
           .at[0, :D1].set(b1.reshape(-1).astype(f32))
           .at[1, :D2].set(b2.reshape(-1).astype(f32))
           .at[2, :D3].set(b3.reshape(-1).astype(f32)))

    # Normalizers use the GLOBAL (unpadded) element counts.
    inv_n1 = 1.0 / float(B * D1)
    inv_n2 = 1.0 / float(B * D2)

    kernel = _make_kernel(tm, B, inv_n1, inv_n2, need_row_mask)

    flops = 2 * B_pad * D * D * 3
    bytes_accessed = (B_pad * D * 2 + 3 * D * D + 3 * D) * 4

    out_p, avg = pl.pallas_call(
        kernel,
        out_shape=(
            jax.ShapeDtypeStruct((B_pad, D), f32),
            jax.ShapeDtypeStruct((1,), f32),
        ),
        grid=(grid,),
        in_specs=[
            pl.BlockSpec((tm, D), lambda i: (i, 0)),        # x: tiled over rows
            pl.BlockSpec((3, D, D), lambda i: (0, 0, 0)),   # weights: resident
            pl.BlockSpec((3, D), lambda i: (0, 0)),         # biases: resident
        ],
        out_specs=(
            pl.BlockSpec((tm, D), lambda i: (i, 0)),        # lane-dense output
            pl.BlockSpec((1,), lambda i: (0,),
                         memory_space=pltpu.MemorySpace.SMEM),
        ),
        scratch_shapes=[pltpu.SMEM((2,), jnp.float32)],     # running |pre| sums
        compiler_params=pltpu.CompilerParams(
            dimension_semantics=("arbitrary",),             # carries accumulator
            vmem_limit_bytes=32 * 1024 * 1024,
        ),
        cost_estimate=pl.CostEstimate(
            flops=flops, transcendentals=0, bytes_accessed=bytes_accessed),
    )(x_p, w_p, b_p)

    return out_p[:B, :D3], avg[0]


def init_params(key, dims):
    """Deterministic init of (w, b, is_relu_with_stats) per layer."""
    params = []
    n_layers = len(dims) - 1
    for i in range(n_layers):
        key, kw, kb = jax.random.split(key, 3)
        d_in, d_out = dims[i], dims[i + 1]
        w = jax.random.normal(kw, (d_in, d_out), jnp.float32) * (1.0 / jnp.sqrt(d_in))
        b = jax.random.normal(kb, (1, d_out), jnp.float32) * 0.1
        is_relu = i < n_layers - 1  # ReluWithStats after every layer but the last
        params.append((w, b, is_relu))
    return params


if __name__ == "__main__":
    key = jax.random.PRNGKey(0)
    key, kx = jax.random.split(key)

    # Small-ish shapes; B deliberately not a multiple of the 256-row tile so the
    # padded-row masking and multi-step accumulator paths are exercised.
    B, D_in, H, D_out = 500, 96, 128, 64
    x = jax.random.normal(kx, (B, D_in), jnp.float32)
    params = init_params(key, (D_in, H, H, D_out))

    out, avg_preact = module_with_stats_forward(x, params)
    jax.block_until_ready(out)
    jax.block_until_ready(avg_preact)

    # Pure-JAX reference (HIGHEST precision so the f32 MXU kernel is comparable).
    def ref_dot(a, b):
        return jnp.dot(a, b, precision=lax.Precision.HIGHEST)

    h_ref = x
    stats_ref = []
    for w, b, is_relu in params:
        pre = ref_dot(h_ref, w) + b
        if is_relu:
            stats_ref.append(jnp.mean(jnp.abs(pre)))
            h_ref = jnp.maximum(pre, 0.0)
        else:
            h_ref = pre
    avg_ref = jnp.mean(jnp.stack(stats_ref))

    assert out.shape == (B, D_out)
    assert jnp.allclose(out, h_ref, atol=1e-4, rtol=1e-4)
    assert jnp.allclose(avg_preact, avg_ref, atol=1e-4, rtol=1e-4)

    print("KERNEL_OK")
</pallas_src>

<mosaic_0001>
module attributes {stable_mosaic.version = 11 : i64} {
  func.func @kernel(%arg0: i32, %arg1: memref<256x128xf32, #tpu.memory_space<vmem>>, %arg2: memref<3x128x128xf32, #tpu.memory_space<vmem>>, %arg3: memref<3x128xf32, #tpu.memory_space<vmem>>, %arg4: memref<256x128xf32, #tpu.memory_space<vmem>>, %arg5: memref<1xf32, #tpu.memory_space<smem>>, %arg6: memref<2xf32, #tpu.memory_space<smem>>) attributes {dimension_semantics = [#tpu.dimension_semantics<arbitrary>], iteration_bounds = array<i64: 2>, scalar_prefetch = 0 : i64, scratch_operands = 1 : i64, tpu.core_type = #tpu.core_type<tc>, window_params = [{transform_indices = @transform_0, window_bounds = array<i64: 256, 128>}, {pipeline_mode = #tpu.pipeline_mode<synchronous>, transform_indices = @transform_1, window_bounds = array<i64: 3, 128, 128>}, {pipeline_mode = #tpu.pipeline_mode<synchronous>, transform_indices = @transform_2, window_bounds = array<i64: 3, 128>}, {transform_indices = @transform_3, window_bounds = array<i64: 256, 128>}, {transform_indices = @transform_4, window_bounds = array<i64: 1>}]} {
    %c0_i32 = arith.constant 0 : i32
    %0 = arith.cmpi eq, %arg0, %c0_i32 : i32
    %1 = arith.extui %0 : i1 to i32
    %c0_i32_0 = arith.constant 0 : i32
    %2 = arith.cmpi ne, %1, %c0_i32_0 : i32
    scf.if %2 {
      %cst_24 = arith.constant 0.000000e+00 : f32
      %c0_25 = arith.constant 0 : index
      %59 = memref.load %arg6[%c0_25] : memref<2xf32, #tpu.memory_space<smem>>
      memref.store %cst_24, %arg6[%c0_25] : memref<2xf32, #tpu.memory_space<smem>>
      %cst_26 = arith.constant 0.000000e+00 : f32
      %c1_27 = arith.constant 1 : index
      %60 = memref.load %arg6[%c1_27] : memref<2xf32, #tpu.memory_space<smem>>
      memref.store %cst_26, %arg6[%c1_27] : memref<2xf32, #tpu.memory_space<smem>>
    } else {
    }
    %c0 = arith.constant 0 : index
    %c0_1 = arith.constant 0 : index
    %3 = vector.load %arg1[%c0, %c0_1] : memref<256x128xf32, #tpu.memory_space<vmem>>, vector<256x128xf32>
    %c0_2 = arith.constant 0 : index
    %c0_3 = arith.constant 0 : index
    %4 = vector.load %arg3[%c0_2, %c0_3] : memref<3x128xf32, #tpu.memory_space<vmem>>, vector<3x128xf32>
    %5 = vector.extract_strided_slice %4 {offsets = [0, 0], sizes = [1, 128], strides = [1, 1]} : vector<3x128xf32> to vector<1x128xf32>
    %6 = vector.extract_strided_slice %4 {offsets = [1, 0], sizes = [1, 128], strides = [1, 1]} : vector<3x128xf32> to vector<1x128xf32>
    %7 = vector.extract_strided_slice %4 {offsets = [2, 0], sizes = [1, 128], strides = [1, 1]} : vector<3x128xf32> to vector<1x128xf32>
    %c256_i32 = arith.constant 256 : i32
    %8 = arith.muli %arg0, %c256_i32 : i32
    %9 = tpu.iota {dimensions = array<i32: 0>} : vector<256x1xi32>
    %10 = vector.broadcast %8 : i32 to vector<256x1xi32>
    %11 = arith.addi %10, %9 : vector<256x1xi32>
    %c500_i32 = arith.constant 500 : i32
    %12 = vector.broadcast %c500_i32 : i32 to vector<256x1xi32>
    %13 = arith.cmpi slt, %11, %12 : vector<256x1xi32>
    %14 = arith.extui %13 : vector<256x1xi1> to vector<256x1xi32>
    %15 = arith.sitofp %14 : vector<256x1xi32> to vector<256x1xf32>
    %c0_4 = arith.constant 0 : index
    %c0_5 = arith.constant 0 : index
    %c0_6 = arith.constant 0 : index
    %16 = vector.load %arg2[%c0_4, %c0_5, %c0_6] : memref<3x128x128xf32, #tpu.memory_space<vmem>>, vector<1x128x128xf32>
    %17 = vector.shape_cast %16 : vector<1x128x128xf32> to vector<128x128xf32>
    %cst = arith.constant dense<0.000000e+00> : vector<256x128xf32>
    %18 = tpu.matmul %3, %17, %cst {dimension_numbers = #tpu.dot_dimension_numbers<[1], [0], [0], [1], [0, 0, 1, 1], [], []>} : vector<256x128xf32>, vector<128x128xf32>, vector<256x128xf32> -> vector<256x128xf32>
    %19 = vector.broadcast %5 : vector<1x128xf32> to vector<256x128xf32>
    %20 = arith.addf %18, %19 : vector<256x128xf32>
    %21 = math.absf %20 : vector<256x128xf32>
    %22 = vector.broadcast %15 : vector<256x1xf32> to vector<256x128xf32>
    %23 = arith.mulf %21, %22 : vector<256x128xf32>
    %24 = vector.shape_cast %23 : vector<256x128xf32> to vector<1x256x128xf32>
    %cst_7 = arith.constant dense<0.000000e+00> : vector<1xf32>
    %25 = vector.multi_reduction <add>, %24, %cst_7 [1, 2] : vector<1x256x128xf32> to vector<1xf32>
    %26 = vector.shape_cast %25 : vector<1xf32> to vector<1x1x1xf32>
    %27 = vector.extract %26[0, 0, 0] : f32 from vector<1x1x1xf32>
    %cst_8 = arith.constant 0.000000e+00 : f32
    %28 = vector.broadcast %cst_8 : f32 to vector<256x128xf32>
    %29 = arith.maximumf %20, %28 : vector<256x128xf32>
    %c1 = arith.constant 1 : index
    %c0_9 = arith.constant 0 : index
    %c0_10 = arith.constant 0 : index
    %30 = vector.load %arg2[%c1, %c0_9, %c0_10] : memref<3x128x128xf32, #tpu.memory_space<vmem>>, vector<1x128x128xf32>
    %31 = vector.shape_cast %30 : vector<1x128x128xf32> to vector<128x128xf32>
    %cst_11 = arith.constant dense<0.000000e+00> : vector<256x128xf32>
    %32 = tpu.matmul %29, %31, %cst_11 {dimension_numbers = #tpu.dot_dimension_numbers<[1], [0], [0], [1], [0, 0, 1, 1], [], []>} : vector<256x128xf32>, vector<128x128xf32>, vector<256x128xf32> -> vector<256x128xf32>
    %33 = vector.broadcast %6 : vector<1x128xf32> to vector<256x128xf32>
    %34 = arith.addf %32, %33 : vector<256x128xf32>
    %35 = math.absf %34 : vector<256x128xf32>
    %36 = vector.broadcast %15 : vector<256x1xf32> to vector<256x128xf32>
    %37 = arith.mulf %35, %36 : vector<256x128xf32>
    %38 = vector.shape_cast %37 : vector<256x128xf32> to vector<1x256x128xf32>
    %cst_12 = arith.constant dense<0.000000e+00> : vector<1xf32>
    %39 = vector.multi_reduction <add>, %38, %cst_12 [1, 2] : vector<1x256x128xf32> to vector<1xf32>
    %40 = vector.shape_cast %39 : vector<1xf32> to vector<1x1x1xf32>
    %41 = vector.extract %40[0, 0, 0] : f32 from vector<1x1x1xf32>
    %cst_13 = arith.constant 0.000000e+00 : f32
    %42 = vector.broadcast %cst_13 : f32 to vector<256x128xf32>
    %43 = arith.maximumf %34, %42 : vector<256x128xf32>
    %c2 = arith.constant 2 : index
    %c0_14 = arith.constant 0 : index
    %c0_15 = arith.constant 0 : index
    %44 = vector.load %arg2[%c2, %c0_14, %c0_15] : memref<3x128x128xf32, #tpu.memory_space<vmem>>, vector<1x128x128xf32>
    %45 = vector.shape_cast %44 : vector<1x128x128xf32> to vector<128x128xf32>
    %cst_16 = arith.constant dense<0.000000e+00> : vector<256x128xf32>
    %46 = tpu.matmul %43, %45, %cst_16 {dimension_numbers = #tpu.dot_dimension_numbers<[1], [0], [0], [1], [0, 0, 1, 1], [], []>} : vector<256x128xf32>, vector<128x128xf32>, vector<256x128xf32> -> vector<256x128xf32>
    %47 = vector.broadcast %7 : vector<1x128xf32> to vector<256x128xf32>
    %48 = arith.addf %46, %47 : vector<256x128xf32>
    %c0_17 = arith.constant 0 : index
    %c0_18 = arith.constant 0 : index
    %49 = vector.load %arg4[%c0_17, %c0_18] : memref<256x128xf32, #tpu.memory_space<vmem>>, vector<256x128xf32>
    tpu.vector_store %arg4[%c0_17, %c0_18], %48 {strides = array<i32>} : memref<256x128xf32, #tpu.memory_space<vmem>>, vector<256x128xf32>,
    %c0_19 = arith.constant 0 : index
    %50 = memref.load %arg6[%c0_19] : memref<2xf32, #tpu.memory_space<smem>>
    %51 = arith.addf %50, %27 : f32
    %c0_20 = arith.constant 0 : index
    %52 = memref.load %arg6[%c0_20] : memref<2xf32, #tpu.memory_space<smem>>
    memref.store %51, %arg6[%c0_20] : memref<2xf32, #tpu.memory_space<smem>>
    %c1_21 = arith.constant 1 : index
    %53 = memref.load %arg6[%c1_21] : memref<2xf32, #tpu.memory_space<smem>>
    %54 = arith.addf %53, %41 : f32
    %c1_22 = arith.constant 1 : index
    %55 = memref.load %arg6[%c1_22] : memref<2xf32, #tpu.memory_space<smem>>
    memref.store %54, %arg6[%c1_22] : memref<2xf32, #tpu.memory_space<smem>>
    %c1_i32 = arith.constant 1 : i32
    %56 = arith.cmpi eq, %arg0, %c1_i32 : i32
    %57 = arith.extui %56 : i1 to i32
    %c0_i32_23 = arith.constant 0 : i32
    %58 = arith.cmpi ne, %57, %c0_i32_23 : i32
    scf.if %58 {
      %c0_24 = arith.constant 0 : index
      %59 = memref.load %arg6[%c0_24] : memref<2xf32, #tpu.memory_space<smem>>
      %cst_25 = arith.constant 1.562500e-05 : f32
      %60 = arith.mulf %59, %cst_25 : f32
      %c1_26 = arith.constant 1 : index
      %61 = memref.load %arg6[%c1_26] : memref<2xf32, #tpu.memory_space<smem>>
      %cst_27 = arith.constant 1.562500e-05 : f32
      %62 = arith.mulf %61, %cst_27 : f32
      %63 = arith.addf %60, %62 : f32
      %cst_28 = arith.constant 5.000000e-01 : f32
      %64 = arith.mulf %63, %cst_28 : f32
      %c0_29 = arith.constant 0 : index
      %65 = memref.load %arg5[%c0_29] : memref<1xf32, #tpu.memory_space<smem>>
      memref.store %64, %arg5[%c0_29] : memref<1xf32, #tpu.memory_space<smem>>
    } else {
    }
    return
  }
  func.func @transform_0(%arg0: i32) -> (i32, i32) {
    %c0_i32 = arith.constant 0 : i32
    %c0_i32_0 = arith.constant 0 : i32
    return %arg0, %c0_i32 : i32, i32
  }
  func.func @transform_1(%arg0: i32) -> (i32, i32, i32) {
    %c0_i32 = arith.constant 0 : i32
    %c0_i32_0 = arith.constant 0 : i32
    %c0_i32_1 = arith.constant 0 : i32
    %c0_i32_2 = arith.constant 0 : i32
    return %c0_i32, %c0_i32_0, %c0_i32_1 : i32, i32, i32
  }
  func.func @transform_2(%arg0: i32) -> (i32, i32) {
    %c0_i32 = arith.constant 0 : i32
    %c0_i32_0 = arith.constant 0 : i32
    %c0_i32_1 = arith.constant 0 : i32
    return %c0_i32, %c0_i32_0 : i32, i32
  }
  func.func @transform_3(%arg0: i32) -> (i32, i32) {
    %c0_i32 = arith.constant 0 : i32
    %c0_i32_0 = arith.constant 0 : i32
    return %arg0, %c0_i32 : i32, i32
  }
  func.func @transform_4(%arg0: i32) -> i32 {
    %c0_i32 = arith.constant 0 : i32
    %c0_i32_0 = arith.constant 0 : i32
    return %c0_i32 : i32
  }
}

</mosaic_0001>

<llo_original>
// kernel: tpu_custom_call.1
$region0: #{tpu_custom_call.1}
  #allocation0 [shape = 'u32[]', space=smem, size = 0x4, offset = 0x4, fixed_abs, tag = 'smem constant byte address 0x4 - core index']
  #allocation1 [shape = 'u32[144,128]{1,0:T(1,128)}', space=vmem, size = 0x12000, scoped, tag = 'internal scratch']
  #allocation2 [shape = 'f32[2]{0:T(128)}', space=smem, size = 0x200, scoped, tag = 'scratch operand']
  %s0 = inlined_call_operand.hbm [shape: f32[512,128], index: 0, kind: input, shape index: {}]
  %s1 = inlined_call_operand.hbm [shape: f32[3,128,128], index: 1, kind: input, shape index: {}]
  %s2 = inlined_call_operand.vmem [shape: f32[3,128], index: 2, kind: input, shape index: {}]
  %s3 = inlined_call_operand.hbm [shape: f32[512,128], index: 3, kind: output, shape index: {0}]
  %s4 = inlined_call_operand.hbm [shape: f32[1], index: 4, kind: output, shape index: {1}]
  %5 = xla_tuple %s3, %s4
  %s6 = sld [smem:[#allocation0]]
  $region69: #{tpu_custom_call.1} parent=0
    _
  %s8 = ssub.s32 1, %s6
  %s9 = scalar_select 0, %s8, %s6
  $region1: #{tpu_custom_call.1} parent=0
    #allocation3 [shape = 'u8[262144]{0}', space=vmem, size = 0x40000, scoped, tag = 'input window, operand 0']
    #allocation4 [shape = 's32[2]{0}', space=sflag, size = 0x8, scoped, tag = 'scoped memory for tpu_custom_call.1']
    #allocation5 [shape = 's32[2]{0}', space=sflag, size = 0x8, scoped, tag = 'scoped memory for tpu_custom_call.1']
    #allocation6 [shape = 's32[2]{0}', space=sflag, size = 0x8, scoped, tag = 'scoped memory for tpu_custom_call.1']
    #allocation7 [shape = 'u8[196608]{0}', space=vmem, size = 0x30000, scoped, tag = 'input window, operand 1, single buffered']
    #allocation8 [shape = 's32[1]{0}', space=sflag, size = 0x4, scoped, tag = 'scoped memory for tpu_custom_call.1']
    #allocation9 [shape = 'u8[262144]{0}', space=vmem, size = 0x40000, scoped, tag = 'output window, operand 0']
    #allocation10 [shape = 'u8[512]{0}', space=smem, size = 0x200, scoped, tag = 'output window, operand 1, single buffered']
    %10 = vsyncpa [#allocation4], 0
    %s11 = scalar_lea.sflag [#allocation4], 1
    %12 = vsyncpa %s11, 0
    %13 = vsyncpa [#allocation8], 0
    %14 = vsyncpa [#allocation5], 0
    %s15 = scalar_lea.sflag [#allocation5], 1
    %16 = vsyncpa %s15, 0
    %17 = vsyncpa [#allocation6], 0
    loop: start=0, step=1, limit=4
    $region2: #{tpu_custom_call.1} parent=1 // loop_pre_header
      _
    $region3: #{tpu_custom_call.1} parent=1 // loop_header
      %s19 = sphi 0, %s23
      %p20 = scmp.ge.s32.totalorder %s19, 4
      %s29 = sphi 0, %s31
      %s32 = sphi 0, %s29
      %s33 = sphi 0, %s32
      %s49 = sphi 0, %s33
      %s53 = sphi 0, %s53
      %s55 = sphi 0, %s53
      %s56 = sphi 0, %s55
      %s70 = sphi 0, %s56
      %s74 = sphi 0, %s74
      %s76 = sphi 0, %s74
      %s77 = sphi 0, %s76
      %s91 = sphi 0, %s77
      %s97 = sphi 0, %s99
      %s100 = sphi 0, %s97
      %s101 = sphi 0, %s100
      %s117 = sphi 0, %s101
      %s121 = sphi 0, %s121
      %s123 = sphi 0, %s121
      %s124 = sphi 0, %s123
      %s138 = sphi 0, %s124
    $region4: #{tpu_custom_call.1} parent=1 // loop_header_branch
      %22 = sbr.rel (%p20) target = $region8
    $region5: #{tpu_custom_call.1} parent=1 // loop_body
      %s24 = ssub.s32 %s19, 1
      %s25 = ssub.s32 %s19, 2
      %s26 = sadd.s32 %s19, 1
      %s27 = ssub.s32 %s19, %s26
      %p28 = scmp.eq.s32.totalorder %s27, 0
      %s30 = sadd.s32 %s29, 1
      %s31 = scalar_select %p28, %s29, %s30
      %p34 = pneg %p28
      %p35 = scmp.eq.s32.totalorder %s19, 1
      %p36 = por %p34, %p35
      %p37 = scmp.ne.s32.totalorder %s29, %s32
      %p38 = scmp.eq.s32.totalorder %s19, 0
      %p39 = por %p37, %p38
      %p40 = scmp.ne.s32.totalorder %s29, %s32
      %p41 = scmp.eq.s32.totalorder %s24, 1
      %p42 = por %p40, %p41
      %p43 = scmp.ne.s32.totalorder %s32, %s33
      %p44 = scmp.eq.s32.totalorder %s24, 0
      %p45 = por %p43, %p44
      %p46 = scmp.ne.s32.totalorder %s32, %s33
      %p47 = scmp.eq.s32.totalorder %s25, 1
      %p48 = por %p46, %p47
      %p50 = scmp.ne.s32.totalorder %s33, %s49
      %p51 = scmp.eq.s32.totalorder %s25, 0
      %p52 = por %p50, %p51
      %s54 = sadd.s32 %s53, 1
      %p57 = scmp.eq.s32.totalorder %s19, 1
      %p58 = scmp.ne.s32.totalorder %s53, %s55
      %p59 = scmp.eq.s32.totalorder %s19, 0
      %p60 = por %p58, %p59
      %p61 = scmp.ne.s32.totalorder %s53, %s55
      %p62 = scmp.eq.s32.totalorder %s24, 1
      %p63 = por %p61, %p62
      %p64 = scmp.ne.s32.totalorder %s55, %s56
      %p65 = scmp.eq.s32.totalorder %s24, 0
      %p66 = por %p64, %p65
      %p67 = scmp.ne.s32.totalorder %s55, %s56
      %p68 = scmp.eq.s32.totalorder %s25, 1
      %p69 = por %p67, %p68
      %p71 = scmp.ne.s32.totalorder %s56, %s70
      %p72 = scmp.eq.s32.totalorder %s25, 0
      %p73 = por %p71, %p72
      %s75 = sadd.s32 %s74, 1
      %p78 = scmp.eq.s32.totalorder %s19, 1
      %p79 = scmp.ne.s32.totalorder %s74, %s76
      %p80 = scmp.eq.s32.totalorder %s19, 0
      %p81 = por %p79, %p80
      %p82 = scmp.ne.s32.totalorder %s74, %s76
      %p83 = scmp.eq.s32.totalorder %s24, 1
      %p84 = por %p82, %p83
      %p85 = scmp.ne.s32.totalorder %s76, %s77
      %p86 = scmp.eq.s32.totalorder %s24, 0
      %p87 = por %p85, %p86
      %p88 = scmp.ne.s32.totalorder %s76, %s77
      %p89 = scmp.eq.s32.totalorder %s25, 1
      %p90 = por %p88, %p89
      %p92 = scmp.ne.s32.totalorder %s77, %s91
      %p93 = scmp.eq.s32.totalorder %s25, 0
      %p94 = por %p92, %p93
      %s95 = ssub.s32 %s19, %s26
      %p96 = scmp.eq.s32.totalorder %s95, 0
      %s98 = sadd.s32 %s97, 1
      %s99 = scalar_select %p96, %s97, %s98
      %p102 = pneg %p96
      %p103 = scmp.eq.s32.totalorder %s19, 1
      %p104 = por %p102, %p103
      %p105 = scmp.ne.s32.totalorder %s97, %s100
      %p106 = scmp.eq.s32.totalorder %s19, 0
      %p107 = por %p105, %p106
      %p108 = scmp.ne.s32.totalorder %s97, %s100
      %p109 = scmp.eq.s32.totalorder %s24, 1
      %p110 = por %p108, %p109
      %p111 = scmp.ne.s32.totalorder %s100, %s101
      %p112 = scmp.eq.s32.totalorder %s24, 0
      %p113 = por %p111, %p112
      %p114 = scmp.ne.s32.totalorder %s100, %s101
      %p115 = scmp.eq.s32.totalorder %s25, 1
      %p116 = por %p114, %p115
      %p118 = scmp.ne.s32.totalorder %s101, %s117
      %p119 = scmp.eq.s32.totalorder %s25, 0
      %p120 = por %p118, %p119
      %s122 = sadd.s32 %s121, 1
      %p125 = scmp.eq.s32.totalorder %s19, 1
      %p126 = scmp.ne.s32.totalorder %s121, %s123
      %p127 = scmp.eq.s32.totalorder %s19, 0
      %p128 = por %p126, %p127
      %p129 = scmp.ne.s32.totalorder %s121, %s123
      %p130 = scmp.eq.s32.totalorder %s24, 1
      %p131 = por %p129, %p130
      %p132 = scmp.ne.s32.totalorder %s123, %s124
      %p133 = scmp.eq.s32.totalorder %s24, 0
      %p134 = por %p132, %p133
      %p135 = scmp.ne.s32.totalorder %s123, %s124
      %p136 = scmp.eq.s32.totalorder %s25, 1
      %p137 = por %p135, %p136
      %p139 = scmp.ne.s32.totalorder %s124, %s138
      %p140 = scmp.eq.s32.totalorder %s25, 0
      %p141 = por %p139, %p140
      %p142 = scmp.le.s32.totalorder 1, %s19
      %p143 = scmp.lt.s32.totalorder %s19, 3
      %p144 = pnand %p142, %p143
      %p145 = pneg %p144
      // Predicated region
      $region9: #{tpu_custom_call.1} parent=5 // pred_check
        _
      $region10: #{tpu_custom_call.1} parent=5 // pred_check_branch
        %147 = sbr.rel (%p144) target = $region12
      $region11: #{tpu_custom_call.1} parent=5 // pred_region
        %s148 = ssub.s32 %s19, 1
        // Predicated region
        $region13: #{tpu_custom_call.1} parent=11 // pred_check
          %p149 = pneg %p66
        $region14: #{tpu_custom_call.1} parent=11 // pred_check_branch
          %151 = sbr.rel (%p149) target = $region16
        $region15: #{tpu_custom_call.1} parent=11 // pred_region
          %s153 = ssub.s32 6144, 6144
          %154 = vsyncadd [#allocation8], %s153
          %s155 = sshll.u32 [#allocation7], 4
          %s156 = int_to_ptr.vmem [resolvable:$true] %s155
          %161 = dma.hbm_to_vmem [thread:$0]  %s1, 6144, %s156, [#allocation8], 128, 128, 8
        $region16: #{tpu_custom_call.1} parent=11 // pred_fallthru
          _
        // Predicated region
        $region17: #{tpu_custom_call.1} parent=11 // pred_check
          %p162 = pneg %p87
        $region18: #{tpu_custom_call.1} parent=11 // pred_check_branch
          %164 = sbr.rel (%p162) target = $region20
        $region19: #{tpu_custom_call.1} parent=11 // pred_region
          _
        $region20: #{tpu_custom_call.1} parent=11 // pred_fallthru
          _
      $region12: #{tpu_custom_call.1} parent=5 // pred_fallthru
        _
      %p165 = scmp.lt.s32.totalorder %s19, 2
      // Predicated region
      $region21: #{tpu_custom_call.1} parent=5 // pred_check
        %p166 = pneg %p165
      $region22: #{tpu_custom_call.1} parent=5 // pred_check_branch
        %168 = sbr.rel (%p166) target = $region24
      $region23: #{tpu_custom_call.1} parent=5 // pred_region
        // Predicated region
        $region25: #{tpu_custom_call.1} parent=23 // pred_check
          %p169 = pneg %p39
        $region26: #{tpu_custom_call.1} parent=23 // pred_check_branch
          %171 = sbr.rel (%p169) target = $region28
        $region27: #{tpu_custom_call.1} parent=23 // pred_region
          %s172 = sand.u32 %s29, 1
          %s173 = scalar_lea.sflag [#allocation4], %s172
          %s174 = sand.u32 %s29, 1
          %s175 = smul.addr %s174, 256
          %s176 = scalar_lea.vmem [#allocation3], %s175
          %s177 = smul.u32 32, %s19
          %s179 = ssub.s32 4096, 4096
          %180 = vsyncadd %s173, %s179
          %s181 = smul.addr %s177, 128
          %s182 = scalar_lea.hbm %s0, %s181
          %s183 = sshll.u32 %s176, 4
          %s184 = int_to_ptr.vmem [resolvable:$true] %s183
          %189 = dma.hbm_to_vmem [thread:$0]  %s182, 4096, %s184, %s173, 128, 128, 8
        $region28: #{tpu_custom_call.1} parent=23 // pred_fallthru
          _
      $region24: #{tpu_custom_call.1} parent=5 // pred_fallthru
        _
      %p190 = scmp.le.s32.totalorder 1, %s19
      %p191 = scmp.lt.s32.totalorder %s19, 3
      %p192 = pnand %p190, %p191
      %p193 = pneg %p192
      // Predicated region
      $region29: #{tpu_custom_call.1} parent=5 // pred_check
        _
      $region30: #{tpu_custom_call.1} parent=5 // pred_check_branch
        %195 = sbr.rel (%p192) target = $region32
      $region31: #{tpu_custom_call.1} parent=5 // pred_region
        %s196 = ssub.s32 %s19, 1
        %s197 = sand.u32 %s32, 1
        %s198 = scalar_lea.sflag [#allocation4], %s197
        %s199 = sand.u32 %s32, 1
        %s200 = smul.addr %s199, 256
        %s201 = scalar_lea.vmem [#allocation3], %s200
        // Predicated region
        $region33: #{tpu_custom_call.1} parent=31 // pred_check
          %p202 = pneg %p45
        $region34: #{tpu_custom_call.1} parent=31 // pred_check_branch
          %204 = sbr.rel (%p202) target = $region36
        $region35: #{tpu_custom_call.1} parent=31 // pred_region
          %205 = dma.done %s198, 4096
        $region36: #{tpu_custom_call.1} parent=31 // pred_fallthru
          _
        // Predicated region
        $region37: #{tpu_custom_call.1} parent=31 // pred_check
          %p206 = pneg %p66
        $region38: #{tpu_custom_call.1} parent=31 // pred_check_branch
          %208 = sbr.rel (%p206) target = $region40
        $region39: #{tpu_custom_call.1} parent=31 // pred_region
          %209 = dma.done [#allocation8], 6144
        $region40: #{tpu_custom_call.1} parent=31 // pred_fallthru
          _
        %s210 = sand.u32 %s32, 1
        %s211 = scalar_lea.sflag [#allocation4], %s210
        %s212 = sand.u32 %s32, 1
        %s213 = smul.addr %s212, 256
        %s214 = scalar_lea.vmem [#allocation3], %s213
        %p215 = pneg %p45
        %p216 = pneg %p42
        %p217 = pneg %p66
        %p218 = pneg %p63
        %p219 = pneg %p87
        %p220 = pneg %p84
        %p221 = pneg %p113
        %p222 = pneg %p110
        %s223 = sand.u32 %s100, 1
        %s224 = scalar_lea.sflag [#allocation5], %s223
        %s225 = sand.u32 %s100, 1
        %s226 = smul.addr %s225, 256
        %s227 = scalar_lea.vmem [#allocation9], %s226
        %p228 = pneg %p134
        %p229 = pneg %p131
        %s230 = smul.u32 32, %s24
        %s231 = smul.u32 32, %s24
        %p232 = scmp.eq.s32.totalorder %s24, 0
        // Predicated region
        $region41: #{tpu_custom_call.1} parent=31 // pred_check
          %p233 = pneg %p232
        $region42: #{tpu_custom_call.1} parent=31 // pred_check_branch
          %235 = sbr.rel (%p233) target = $region44
        $region43: #{tpu_custom_call.1} parent=31 // pred_region
          %s236 = scalar_lea.smem [#allocation2], 0
          %237 = sst [smem:[%s236]] 0.0
          %s238 = scalar_lea.smem [#allocation2], 1
          %239 = sst [smem:[%s238]] 0.0
        $region44: #{tpu_custom_call.1} parent=31 // pred_fallthru
          _
        %v240 = vld [vmem:[%s201] sm:$0xff]
        %v241 = vld [vmem:[%s201 + $0x8] sm:$0xff]
        %v242 = vld [vmem:[%s201 + $0x10] sm:$0xff]
        %v243 = vld [vmem:[%s201 + $0x18] sm:$0xff]
        %v244 = vld [vmem:[%s201 + $0x20] sm:$0xff]
        %v245 = vld [vmem:[%s201 + $0x28] sm:$0xff]
        %v246 = vld [vmem:[%s201 + $0x30] sm:$0xff]
        %v247 = vld [vmem:[%s201 + $0x38] sm:$0xff]
        %v248 = vld [vmem:[%s201 + $0x40] sm:$0xff]
        %v249 = vld [vmem:[%s201 + $0x48] sm:$0xff]
        %v250 = vld [vmem:[%s201 + $0x50] sm:$0xff]
        %v251 = vld [vmem:[%s201 + $0x58] sm:$0xff]
        %v252 = vld [vmem:[%s201 + $0x60] sm:$0xff]
        %v253 = vld [vmem:[%s201 + $0x68] sm:$0xff]
        %v254 = vld [vmem:[%s201 + $0x70] sm:$0xff]
        %v255 = vld [vmem:[%s201 + $0x78] sm:$0xff]
        %v256 = vld [vmem:[%s201 + $0x80] sm:$0xff]
        %v257 = vld [vmem:[%s201 + $0x88] sm:$0xff]
        %v258 = vld [vmem:[%s201 + $0x90] sm:$0xff]
        %v259 = vld [vmem:[%s201 + $0x98] sm:$0xff]
        %v260 = vld [vmem:[%s201 + $0xa0] sm:$0xff]
        %v261 = vld [vmem:[%s201 + $0xa8] sm:$0xff]
        %v262 = vld [vmem:[%s201 + $0xb0] sm:$0xff]
        %v263 = vld [vmem:[%s201 + $0xb8] sm:$0xff]
        %v264 = vld [vmem:[%s201 + $0xc0] sm:$0xff]
        %v265 = vld [vmem:[%s201 + $0xc8] sm:$0xff]
        %v266 = vld [vmem:[%s201 + $0xd0] sm:$0xff]
        %v267 = vld [vmem:[%s201 + $0xd8] sm:$0xff]
        %v268 = vld [vmem:[%s201 + $0xe0] sm:$0xff]
        %v269 = vld [vmem:[%s201 + $0xe8] sm:$0xff]
        %v270 = vld [vmem:[%s201 + $0xf0] sm:$0xff]
        %v271 = vld [vmem:[%s201 + $0xf8] sm:$0xff]
        %v272 = vld [vmem:[%s2] sm:$0x7]
        %s273 = smul.u32 %s24, 256
        %v274 = vlaneseq
        %v275 = vshrl.u32 %v274, 7
        %v276 = vadd.s32 %v275, 8
        %v277 = vadd.s32 %v275, 16
        %v278 = vadd.s32 %v275, 24
        %v279 = vadd.s32 %v275, 32
        %v280 = vadd.s32 %v275, 40
        %v281 = vadd.s32 %v275, 48
        %v282 = vadd.s32 %v275, 56
        %v283 = vadd.s32 %v275, 64
        %v284 = vadd.s32 %v275, 72
        %v285 = vadd.s32 %v275, 80
        %v286 = vadd.s32 %v275, 88
        %v287 = vadd.s32 %v275, 96
        %v288 = vadd.s32 %v275, 104
        %v289 = vadd.s32 %v275, 112
        %v290 = vadd.s32 %v275, 120
        %v291 = vadd.s32 %v275, 128
        %v292 = vadd.s32 %v275, 136
        %v293 = vadd.s32 %v275, 144
        %v294 = vadd.s32 %v275, 152
        %v295 = vadd.s32 %v275, 160
        %v296 = vadd.s32 %v275, 168
        %v297 = vadd.s32 %v275, 176
        %v298 = vadd.s32 %v275, 184
        %v299 = vadd.s32 %v275, 192
        %v300 = vadd.s32 %v275, 200
        %v301 = vadd.s32 %v275, 208
        %v302 = vadd.s32 %v275, 216
        %v303 = vadd.s32 %v275, 224
        %v304 = vadd.s32 %v275, 232
        %v305 = vadd.s32 %v275, 240
        %v306 = vadd.s32 %v275, 248
        %v307 = vstv %s273
        %v308 = vadd.s32 %v307, %v275
        %v309 = vadd.s32 %v307, %v276
        %v310 = vadd.s32 %v307, %v277
        %v311 = vadd.s32 %v307, %v278
        %v312 = vadd.s32 %v307, %v279
        %v313 = vadd.s32 %v307, %v280
        %v314 = vadd.s32 %v307, %v281
        %v315 = vadd.s32 %v307, %v282
        %v316 = vadd.s32 %v307, %v283
        %v317 = vadd.s32 %v307, %v284
        %v318 = vadd.s32 %v307, %v285
        %v319 = vadd.s32 %v307, %v286
        %v320 = vadd.s32 %v307, %v287
        %v321 = vadd.s32 %v307, %v288
        %v322 = vadd.s32 %v307, %v289
        %v323 = vadd.s32 %v307, %v290
        %v324 = vadd.s32 %v307, %v291
        %v325 = vadd.s32 %v307, %v292
        %v326 = vadd.s32 %v307, %v293
        %v327 = vadd.s32 %v307, %v294
        %v328 = vadd.s32 %v307, %v295
        %v329 = vadd.s32 %v307, %v296
        %v330 = vadd.s32 %v307, %v297
        %v331 = vadd.s32 %v307, %v298
        %v332 = vadd.s32 %v307, %v299
        %v333 = vadd.s32 %v307, %v300
        %v334 = vadd.s32 %v307, %v301
        %v335 = vadd.s32 %v307, %v302
        %v336 = vadd.s32 %v307, %v303
        %v337 = vadd.s32 %v307, %v304
        %v338 = vadd.s32 %v307, %v305
        %v339 = vadd.s32 %v307, %v306
        %vm340 = vcmp.lt.s32.totalorder %v308, 500
        %vm341 = vcmp.lt.s32.totalorder %v309, 500
        %vm342 = vcmp.lt.s32.totalorder %v310, 500
        %vm343 = vcmp.lt.s32.totalorder %v311, 500
        %vm344 = vcmp.lt.s32.totalorder %v312, 500
        %vm345 = vcmp.lt.s32.totalorder %v313, 500
        %vm346 = vcmp.lt.s32.totalorder %v314, 500
        %vm347 = vcmp.lt.s32.totalorder %v315, 500
        %vm348 = vcmp.lt.s32.totalorder %v316, 500
        %vm349 = vcmp.lt.s32.totalorder %v317, 500
        %vm350 = vcmp.lt.s32.totalorder %v318, 500
        %vm351 = vcmp.lt.s32.totalorder %v319, 500
        %vm352 = vcmp.lt.s32.totalorder %v320, 500
        %vm353 = vcmp.lt.s32.totalorder %v321, 500
        %vm354 = vcmp.lt.s32.totalorder %v322, 500
        %vm355 = vcmp.lt.s32.totalorder %v323, 500
        %vm356 = vcmp.lt.s32.totalorder %v324, 500
        %vm357 = vcmp.lt.s32.totalorder %v325, 500
        %vm358 = vcmp.lt.s32.totalorder %v326, 500
        %vm359 = vcmp.lt.s32.totalorder %v327, 500
        %vm360 = vcmp.lt.s32.totalorder %v328, 500
        %vm361 = vcmp.lt.s32.totalorder %v329, 500
        %vm362 = vcmp.lt.s32.totalorder %v330, 500
        %vm363 = vcmp.lt.s32.totalorder %v331, 500
        %vm364 = vcmp.lt.s32.totalorder %v332, 500
        %vm365 = vcmp.lt.s32.totalorder %v333, 500
        %vm366 = vcmp.lt.s32.totalorder %v334, 500
        %vm367 = vcmp.lt.s32.totalorder %v335, 500
        %vm368 = vcmp.lt.s32.totalorder %v336, 500
        %vm369 = vcmp.lt.s32.totalorder %v337, 500
        %vm370 = vcmp.lt.s32.totalorder %v338, 500
        %vm371 = vcmp.lt.s32.totalorder %v339, 500
        %v372 = vsel %vm340, 1, 0
        %v373 = vsel %vm341, 1, 0
        %v374 = vsel %vm342, 1, 0
        %v375 = vsel %vm343, 1, 0
        %v376 = vsel %vm344, 1, 0
        %v377 = vsel %vm345, 1, 0
        %v378 = vsel %vm346, 1, 0
        %v379 = vsel %vm347, 1, 0
        %v380 = vsel %vm348, 1, 0
        %v381 = vsel %vm349, 1, 0
        %v382 = vsel %vm350, 1, 0
        %v383 = vsel %vm351, 1, 0
        %v384 = vsel %vm352, 1, 0
        %v385 = vsel %vm353, 1, 0
        %v386 = vsel %vm354, 1, 0
        %v387 = vsel %vm355, 1, 0
        %v388 = vsel %vm356, 1, 0
        %v389 = vsel %vm357, 1, 0
        %v390 = vsel %vm358, 1, 0
        %v391 = vsel %vm359, 1, 0
        %v392 = vsel %vm360, 1, 0
        %v393 = vsel %vm361, 1, 0
        %v394 = vsel %vm362, 1, 0
        %v395 = vsel %vm363, 1, 0
        %v396 = vsel %vm364, 1, 0
        %v397 = vsel %vm365, 1, 0
        %v398 = vsel %vm366, 1, 0
        %v399 = vsel %vm367, 1, 0
        %v400 = vsel %vm368, 1, 0
        %v401 = vsel %vm369, 1, 0
        %v402 = vsel %vm370, 1, 0
        %v403 = vsel %vm371, 1, 0
        %v404 = vcvt.s32.f32 %v372
        %v405 = vcvt.s32.f32 %v373
        %v406 = vcvt.s32.f32 %v374
        %v407 = vcvt.s32.f32 %v375
        %v408 = vcvt.s32.f32 %v376
        %v409 = vcvt.s32.f32 %v377
        %v410 = vcvt.s32.f32 %v378
        %v411 = vcvt.s32.f32 %v379
        %v412 = vcvt.s32.f32 %v380
        %v413 = vcvt.s32.f32 %v381
        %v414 = vcvt.s32.f32 %v382
        %v415 = vcvt.s32.f32 %v383
        %v416 = vcvt.s32.f32 %v384
        %v417 = vcvt.s32.f32 %v385
        %v418 = vcvt.s32.f32 %v386
        %v419 = vcvt.s32.f32 %v387
        %v420 = vcvt.s32.f32 %v388
        %v421 = vcvt.s32.f32 %v389
        %v422 = vcvt.s32.f32 %v390
        %v423 = vcvt.s32.f32 %v391
        %v424 = vcvt.s32.f32 %v392
        %v425 = vcvt.s32.f32 %v393
        %v426 = vcvt.s32.f32 %v394
        %v427 = vcvt.s32.f32 %v395
        %v428 = vcvt.s32.f32 %v396
        %v429 = vcvt.s32.f32 %v397
        %v430 = vcvt.s32.f32 %v398
        %v431 = vcvt.s32.f32 %v399
        %v432 = vcvt.s32.f32 %v400
        %v433 = vcvt.s32.f32 %v401
        %v434 = vcvt.s32.f32 %v402
        %v435 = vcvt.s32.f32 %v403
        %v436 = vld [vmem:[#allocation7] sm:$0xff]
        %v437 = vld [vmem:[#allocation7 + $0x8] sm:$0xff]
        %v438 = vld [vmem:[#allocation7 + $0x10] sm:$0xff]
        %v439 = vld [vmem:[#allocation7 + $0x18] sm:$0xff]
        %v440 = vld [vmem:[#allocation7 + $0x20] sm:$0xff]
        %v441 = vld [vmem:[#allocation7 + $0x28] sm:$0xff]
        %v442 = vld [vmem:[#allocation7 + $0x30] sm:$0xff]
        %v443 = vld [vmem:[#allocation7 + $0x38] sm:$0xff]
        %v444 = vld [vmem:[#allocation7 + $0x40] sm:$0xff]
        %v445 = vld [vmem:[#allocation7 + $0x48] sm:$0xff]
        %v446 = vld [vmem:[#allocation7 + $0x50] sm:$0xff]
        %v447 = vld [vmem:[#allocation7 + $0x58] sm:$0xff]
        %v448 = vld [vmem:[#allocation7 + $0x60] sm:$0xff]
        %v449 = vld [vmem:[#allocation7 + $0x68] sm:$0xff]
        %v450 = vld [vmem:[#allocation7 + $0x70] sm:$0xff]
        %v451 = vld [vmem:[#allocation7 + $0x78] sm:$0xff]
        %v452 = vlaneseq
        %v453 = vshrl.u32 %v452, 7
        %v454 = vsub.s32 0, %v453
        %v455 = vrot.slane %v272, %v454
        %456 = vmatprep.subr.mxu0 0.0
        %457 = vmatpush1.msra.mxu0 %v436
        %458 = vmatprep.subr.mxu0 0.0
        %459 = vmatpush1.msra.mxu0 %v437
        %460 = vmatprep.subr.mxu0 0.0
        %461 = vmatpush1.msra.mxu0 %v438
        %462 = vmatprep.subr.mxu0 0.0
        %463 = vmatpush1.msra.mxu0 %v439
        %464 = vmatprep.subr.mxu0 0.0
        %465 = vmatpush1.msra.mxu0 %v440
        %466 = vmatprep.subr.mxu0 0.0
        %467 = vmatpush1.msra.mxu0 %v441
        %468 = vmatprep.subr.mxu0 0.0
        %469 = vmatpush1.msra.mxu0 %v442
        %470 = vmatprep.subr.mxu0 0.0
        %471 = vmatpush1.msra.mxu0 %v443
        %472 = vmatprep.subr.mxu0 0.0
        %473 = vmatpush1.msra.mxu0 %v444
        %474 = vmatprep.subr.mxu0 0.0
        %475 = vmatpush1.msra.mxu0 %v445
        %476 = vmatprep.subr.mxu0 0.0
        %477 = vmatpush1.msra.mxu0 %v446
        %478 = vmatprep.subr.mxu0 0.0
        %479 = vmatpush1.msra.mxu0 %v447
        %480 = vmatprep.subr.mxu0 0.0
        %481 = vmatpush1.msra.mxu0 %v448
        %482 = vmatprep.subr.mxu0 0.0
        %483 = vmatpush1.msra.mxu0 %v449
        %484 = vmatprep.subr.mxu0 0.0
        %485 = vmatpush1.msra.mxu0 %v450
        %486 = vmatprep.subr.mxu0 0.0
        %487 = vmatpush1.msra.mxu0 %v451
        %488 = vmatprep.subr.mxu0 0.0
        %489 = vmatpush1.msra.mxu0 0.0
        %490 = vmatprep.subr.mxu0 0.0
        %491 = vmatpush1.msra.mxu0 0.0
        %492 = vmatprep.subr.mxu0 0.0
        %493 = vmatpush1.msra.mxu0 0.0
        %494 = vmatprep.subr.mxu0 0.0
        %495 = vmatpush1.msra.mxu0 0.0
        %496 = vmatprep.subr.mxu0 0.0
        %497 = vmatpush1.msra.mxu0 0.0
        %498 = vmatprep.subr.mxu0 0.0
        %499 = vmatpush1.msra.mxu0 0.0
        %500 = vmatprep.subr.mxu0 0.0
        %501 = vmatpush1.msra.mxu0 0.0
        %502 = vmatprep.subr.mxu0 0.0
        %503 = vmatpush1.msra.mxu0 0.0
        %504 = vmatprep.subr.mxu0 0.0
        %505 = vmatpush1.msra.mxu0 0.0
        %506 = vmatprep.subr.mxu0 0.0
        %507 = vmatpush1.msra.mxu0 0.0
        %508 = vmatprep.subr.mxu0 0.0
        %509 = vmatpush1.msra.mxu0 0.0
        %510 = vmatprep.subr.mxu0 0.0
        %511 = vmatpush1.msra.mxu0 0.0
        %512 = vmatprep.subr.mxu0 0.0
        %513 = vmatpush1.msra.mxu0 0.0
        %514 = vmatprep.subr.mxu0 0.0
        %515 = vmatpush1.msra.mxu0 0.0
        %516 = vmatprep.subr.mxu0 0.0
        %517 = vmatpush1.msra.mxu0 0.0
        %518 = vmatprep.subr.mxu0 0.0
        %519 = vmatpush1.msra.mxu0 0.0
        %520 = vmatprep.mubr.f32.mxu0 0.0
        %521 = vmatmul.mubr.f32.gmra.mrb[0].mxu0 %v240
        %v522 = vpop.f32.mrb[0].mxu0
        %v523 = vadd.f32 %v455, %v522
        %v524 = vpop.f32.mrb[0].mxu0
        %525 = vmatprep.mubr.f32.mxu0 0.0
        %526 = vmatmul.mubr.f32.gmra.mrb[0].mxu0 %v241
        %v527 = vpop.f32.mrb[0].mxu0
        %v528 = vadd.f32 %v455, %v527
        %v529 = vpop.f32.mrb[0].mxu0
        %530 = vmatprep.mubr.f32.mxu0 0.0
        %531 = vmatmul.mubr.f32.gmra.mrb[0].mxu0 %v242
        %v532 = vpop.f32.mrb[0].mxu0
        %v533 = vadd.f32 %v455, %v532
        %v534 = vpop.f32.mrb[0].mxu0
        %535 = vmatprep.mubr.f32.mxu0 0.0
        %536 = vmatmul.mubr.f32.gmra.mrb[0].mxu0 %v243
        %v537 = vpop.f32.mrb[0].mxu0
        %v538 = vadd.f32 %v455, %v537
        %v539 = vpop.f32.mrb[0].mxu0
        %540 = vmatprep.mubr.f32.mxu0 0.0
        %541 = vmatmul.mubr.f32.gmra.mrb[0].mxu0 %v244
        %v542 = vpop.f32.mrb[0].mxu0
        %v543 = vadd.f32 %v455, %v542
        %v544 = vpop.f32.mrb[0].mxu0
        %545 = vmatprep.mubr.f32.mxu0 0.0
        %546 = vmatmul.mubr.f32.gmra.mrb[0].mxu0 %v245
        %v547 = vpop.f32.mrb[0].mxu0
        %v548 = vadd.f32 %v455, %v547
        %v549 = vpop.f32.mrb[0].mxu0
        %550 = vmatprep.mubr.f32.mxu0 0.0
        %551 = vmatmul.mubr.f32.gmra.mrb[0].mxu0 %v246
        %v552 = vpop.f32.mrb[0].mxu0
        %v553 = vadd.f32 %v455, %v552
        %v554 = vpop.f32.mrb[0].mxu0
        %555 = vmatprep.mubr.f32.mxu0 0.0
        %556 = vmatmul.mubr.f32.gmra.mrb[0].mxu0 %v247
        %v557 = vpop.f32.mrb[0].mxu0
        %v558 = vadd.f32 %v455, %v557
        %v559 = vpop.f32.mrb[0].mxu0
        %560 = vmatprep.mubr.f32.mxu0 0.0
        %561 = vmatmul.mubr.f32.gmra.mrb[0].mxu0 %v248
        %v562 = vpop.f32.mrb[0].mxu0
        %v563 = vadd.f32 %v455, %v562
        %v564 = vpop.f32.mrb[0].mxu0
        %565 = vmatprep.mubr.f32.mxu0 0.0
        %566 = vmatmul.mubr.f32.gmra.mrb[0].mxu0 %v249
        %v567 = vpop.f32.mrb[0].mxu0
        %v568 = vadd.f32 %v455, %v567
        %v569 = vpop.f32.mrb[0].mxu0
        %570 = vmatprep.mubr.f32.mxu0 0.0
        %571 = vmatmul.mubr.f32.gmra.mrb[0].mxu0 %v250
        %v572 = vpop.f32.mrb[0].mxu0
        %v573 = vadd.f32 %v455, %v572
        %v574 = vpop.f32.mrb[0].mxu0
        %575 = vmatprep.mubr.f32.mxu0 0.0
        %576 = vmatmul.mubr.f32.gmra.mrb[0].mxu0 %v251
        %v577 = vpop.f32.mrb[0].mxu0
        %v578 = vadd.f32 %v455, %v577
        %v579 = vpop.f32.mrb[0].mxu0
        %580 = vmatprep.mubr.f32.mxu0 0.0
        %581 = vmatmul.mubr.f32.gmra.mrb[0].mxu0 %v252
        %v582 = vpop.f32.mrb[0].mxu0
        %v583 = vadd.f32 %v455, %v582
        %v584 = vpop.f32.mrb[0].mxu0
        %585 = vmatprep.mubr.f32.mxu0 0.0
        %586 = vmatmul.mubr.f32.gmra.mrb[0].mxu0 %v253
        %v587 = vpop.f32.mrb[0].mxu0
        %v588 = vadd.f32 %v455, %v587
        %v589 = vpop.f32.mrb[0].mxu0
        %590 = vmatprep.mubr.f32.mxu0 0.0
        %591 = vmatmul.mubr.f32.gmra.mrb[0].mxu0 %v254
        %v592 = vpop.f32.mrb[0].mxu0
        %v593 = vadd.f32 %v455, %v592
        %v594 = vpop.f32.mrb[0].mxu0
        %595 = vmatprep.mubr.f32.mxu0 0.0
        %596 = vmatmul.mubr.f32.gmra.mrb[0].mxu0 %v255
        %v597 = vpop.f32.mrb[0].mxu0
        %v598 = vadd.f32 %v455, %v597
        %v599 = vpop.f32.mrb[0].mxu0
        %600 = vmatprep.mubr.f32.mxu0 0.0
        %601 = vmatmul.mubr.f32.gmra.mrb[0].mxu0 %v256
        %v602 = vpop.f32.mrb[0].mxu0
        %v603 = vadd.f32 %v455, %v602
        %v604 = vpop.f32.mrb[0].mxu0
        %605 = vmatprep.mubr.f32.mxu0 0.0
        %606 = vmatmul.mubr.f32.gmra.mrb[0].mxu0 %v257
        %v607 = vpop.f32.mrb[0].mxu0
        %v608 = vadd.f32 %v455, %v607
        %v609 = vpop.f32.mrb[0].mxu0
        %610 = vmatprep.mubr.f32.mxu0 0.0
        %611 = vmatmul.mubr.f32.gmra.mrb[0].mxu0 %v258
        %v612 = vpop.f32.mrb[0].mxu0
        %v613 = vadd.f32 %v455, %v612
        %v614 = vpop.f32.mrb[0].mxu0
        %615 = vmatprep.mubr.f32.mxu0 0.0
        %616 = vmatmul.mubr.f32.gmra.mrb[0].mxu0 %v259
        %v617 = vpop.f32.mrb[0].mxu0
        %v618 = vadd.f32 %v455, %v617
        %v619 = vpop.f32.mrb[0].mxu0
        %620 = vmatprep.mubr.f32.mxu0 0.0
        %621 = vmatmul.mubr.f32.gmra.mrb[0].mxu0 %v260
        %v622 = vpop.f32.mrb[0].mxu0
        %v623 = vadd.f32 %v455, %v622
        %v624 = vpop.f32.mrb[0].mxu0
        %625 = vmatprep.mubr.f32.mxu0 0.0
        %626 = vmatmul.mubr.f32.gmra.mrb[0].mxu0 %v261
        %v627 = vpop.f32.mrb[0].mxu0
        %v628 = vadd.f32 %v455, %v627
        %v629 = vpop.f32.mrb[0].mxu0
        %630 = vmatprep.mubr.f32.mxu0 0.0
        %631 = vmatmul.mubr.f32.gmra.mrb[0].mxu0 %v262
        %v632 = vpop.f32.mrb[0].mxu0
        %v633 = vadd.f32 %v455, %v632
        %v634 = vpop.f32.mrb[0].mxu0
        %635 = vmatprep.mubr.f32.mxu0 0.0
        %636 = vmatmul.mubr.f32.gmra.mrb[0].mxu0 %v263
        %v637 = vpop.f32.mrb[0].mxu0
        %v638 = vadd.f32 %v455, %v637
        %v639 = vpop.f32.mrb[0].mxu0
        %640 = vmatprep.mubr.f32.mxu0 0.0
        %641 = vmatmul.mubr.f32.gmra.mrb[0].mxu0 %v264
        %v642 = vpop.f32.mrb[0].mxu0
        %v643 = vadd.f32 %v455, %v642
        %v644 = vpop.f32.mrb[0].mxu0
        %645 = vmatprep.mubr.f32.mxu0 0.0
        %646 = vmatmul.mubr.f32.gmra.mrb[0].mxu0 %v265
        %v647 = vpop.f32.mrb[0].mxu0
        %v648 = vadd.f32 %v455, %v647
        %v649 = vpop.f32.mrb[0].mxu0
        %650 = vmatprep.mubr.f32.mxu0 0.0
        %651 = vmatmul.mubr.f32.gmra.mrb[0].mxu0 %v266
        %v652 = vpop.f32.mrb[0].mxu0
        %v653 = vadd.f32 %v455, %v652
        %v654 = vpop.f32.mrb[0].mxu0
        %655 = vmatprep.mubr.f32.mxu0 0.0
        %656 = vmatmul.mubr.f32.gmra.mrb[0].mxu0 %v267
        %v657 = vpop.f32.mrb[0].mxu0
        %v658 = vadd.f32 %v455, %v657
        %v659 = vpop.f32.mrb[0].mxu0
        %660 = vmatprep.mubr.f32.mxu0 0.0
        %661 = vmatmul.mubr.f32.gmra.mrb[0].mxu0 %v268
        %v662 = vpop.f32.mrb[0].mxu0
        %v663 = vadd.f32 %v455, %v662
        %v664 = vpop.f32.mrb[0].mxu0
        %665 = vmatprep.mubr.f32.mxu0 0.0
        %666 = vmatmul.mubr.f32.gmra.mrb[0].mxu0 %v269
        %v667 = vpop.f32.mrb[0].mxu0
        %v668 = vadd.f32 %v455, %v667
        %v669 = vpop.f32.mrb[0].mxu0
        %670 = vmatprep.mubr.f32.mxu0 0.0
        %671 = vmatmul.mubr.f32.gmra.mrb[0].mxu0 %v270
        %v672 = vpop.f32.mrb[0].mxu0
        %v673 = vadd.f32 %v455, %v672
        %v674 = vpop.f32.mrb[0].mxu0
        %675 = vmatprep.mubr.f32.mxu0 0.0
        %676 = vmatmul.mubr.f32.gmra.mrb[0].mxu0 %v271
        %v677 = vpop.f32.mrb[0].mxu0
        %v678 = vadd.f32 %v455, %v677
        %v679 = vpop.f32.mrb[0].mxu0
        %680 = vdwg.mxu0
        %v681 = vand.u32 2147483647, %v523
        %v682 = vand.u32 2147483647, %v528
        %v683 = vand.u32 2147483647, %v533
        %v684 = vand.u32 2147483647, %v538
        %v685 = vand.u32 2147483647, %v543
        %v686 = vand.u32 2147483647, %v548
        %v687 = vand.u32 2147483647, %v553
        %v688 = vand.u32 2147483647, %v558
        %v689 = vand.u32 2147483647, %v563
        %v690 = vand.u32 2147483647, %v568
        %v691 = vand.u32 2147483647, %v573
        %v692 = vand.u32 2147483647, %v578
        %v693 = vand.u32 2147483647, %v583
        %v694 = vand.u32 2147483647, %v588
        %v695 = vand.u32 2147483647, %v593
        %v696 = vand.u32 2147483647, %v598
        %v697 = vand.u32 2147483647, %v603
        %v698 = vand.u32 2147483647, %v608
        %v699 = vand.u32 2147483647, %v613
        %v700 = vand.u32 2147483647, %v618
        %v701 = vand.u32 2147483647, %v623
        %v702 = vand.u32 2147483647, %v628
        %v703 = vand.u32 2147483647, %v633
        %v704 = vand.u32 2147483647, %v638
        %v705 = vand.u32 2147483647, %v643
        %v706 = vand.u32 2147483647, %v648
        %v707 = vand.u32 2147483647, %v653
        %v708 = vand.u32 2147483647, %v658
        %v709 = vand.u32 2147483647, %v663
        %v710 = vand.u32 2147483647, %v668
        %v711 = vand.u32 2147483647, %v673
        %v712 = vand.u32 2147483647, %v678
        %v713 = vmul.f32 %v681, %v404
        %v714 = vmul.f32 %v682, %v405
        %v715 = vmul.f32 %v683, %v406
        %v716 = vmul.f32 %v684, %v407
        %v717 = vmul.f32 %v685, %v408
        %v718 = vmul.f32 %v686, %v409
        %v719 = vmul.f32 %v687, %v410
        %v720 = vmul.f32 %v688, %v411
        %v721 = vmul.f32 %v689, %v412
        %v722 = vmul.f32 %v690, %v413
        %v723 = vmul.f32 %v691, %v414
        %v724 = vmul.f32 %v692, %v415
        %v725 = vmul.f32 %v693, %v416
        %v726 = vmul.f32 %v694, %v417
        %v727 = vmul.f32 %v695, %v418
        %v728 = vmul.f32 %v696, %v419
        %v729 = vmul.f32 %v697, %v420
        %v730 = vmul.f32 %v698, %v421
        %v731 = vmul.f32 %v699, %v422
        %v732 = vmul.f32 %v700, %v423
        %v733 = vmul.f32 %v701, %v424
        %v734 = vmul.f32 %v702, %v425
        %v735 = vmul.f32 %v703, %v426
        %v736 = vmul.f32 %v704, %v427
        %v737 = vmul.f32 %v705, %v428
        %v738 = vmul.f32 %v706, %v429
        %v739 = vmul.f32 %v707, %v430
        %v740 = vmul.f32 %v708, %v431
        %v741 = vmul.f32 %v709, %v432
        %v742 = vmul.f32 %v710, %v433
        %v743 = vmul.f32 %v711, %v434
        %v744 = vmul.f32 %v712, %v435
        %v745 = vadd.f32 %v713, %v714
        %v746 = vadd.f32 %v745, %v715
        %v747 = vadd.f32 %v746, %v716
        %v748 = vadd.f32 %v747, %v717
        %v749 = vadd.f32 %v748, %v718
        %v750 = vadd.f32 %v749, %v719
        %v751 = vadd.f32 %v750, %v720
        %v752 = vadd.f32 %v751, %v721
        %v753 = vadd.f32 %v752, %v722
        %v754 = vadd.f32 %v753, %v723
        %v755 = vadd.f32 %v754, %v724
        %v756 = vadd.f32 %v755, %v725
        %v757 = vadd.f32 %v756, %v726
        %v758 = vadd.f32 %v757, %v727
        %v759 = vadd.f32 %v758, %v728
        %v760 = vadd.f32 %v759, %v729
        %v761 = vadd.f32 %v760, %v730
        %v762 = vadd.f32 %v761, %v731
        %v763 = vadd.f32 %v762, %v732
        %v764 = vadd.f32 %v763, %v733
        %v765 = vadd.f32 %v764, %v734
        %v766 = vadd.f32 %v765, %v735
        %v767 = vadd.f32 %v766, %v736
        %v768 = vadd.f32 %v767, %v737
        %v769 = vadd.f32 %v768, %v738
        %v770 = vadd.f32 %v769, %v739
        %v771 = vadd.f32 %v770, %v740
        %v772 = vadd.f32 %v771, %v741
        %v773 = vadd.f32 %v772, %v742
        %v774 = vadd.f32 %v773, %v743
        %v775 = vadd.f32 %v774, %v744
        %776 = vadd.xlane.f32.xlu0 %v775
        %v777 = vpop.xlane.xlu0 %776
        %v778 = vrot.slane %v777, 4
        %v779 = vadd.f32 %v777, %v778
        %v780 = vrot.slane %v779, 2
        %v781 = vadd.f32 %v779, %v780
        %v782 = vrot.slane %v781, 1
        %v783 = vadd.f32 %v781, %v782
        %s784 = vtos %v783
        %v785 = vmax.f32 %v523, 0.0
        %v786 = vmax.f32 %v528, 0.0
        %v787 = vmax.f32 %v533, 0.0
        %v788 = vmax.f32 %v538, 0.0
        %v789 = vmax.f32 %v543, 0.0
        %v790 = vmax.f32 %v548, 0.0
        %v791 = vmax.f32 %v553, 0.0
        %v792 = vmax.f32 %v558, 0.0
        %v793 = vmax.f32 %v563, 0.0
        %v794 = vmax.f32 %v568, 0.0
        %v795 = vmax.f32 %v573, 0.0
        %v796 = vmax.f32 %v578, 0.0
        %v797 = vmax.f32 %v583, 0.0
        %v798 = vmax.f32 %v588, 0.0
        %v799 = vmax.f32 %v593, 0.0
        %v800 = vmax.f32 %v598, 0.0
        %v801 = vmax.f32 %v603, 0.0
        %v802 = vmax.f32 %v608, 0.0
        %v803 = vmax.f32 %v613, 0.0
        %v804 = vmax.f32 %v618, 0.0
        %v805 = vmax.f32 %v623, 0.0
        %v806 = vmax.f32 %v628, 0.0
        %v807 = vmax.f32 %v633, 0.0
        %v808 = vmax.f32 %v638, 0.0
        %v809 = vmax.f32 %v643, 0.0
        %v810 = vmax.f32 %v648, 0.0
        %v811 = vmax.f32 %v653, 0.0
        %v812 = vmax.f32 %v658, 0.0
        %v813 = vmax.f32 %v663, 0.0
        %v814 = vmax.f32 %v668, 0.0
        %v815 = vmax.f32 %v673, 0.0
        %v816 = vmax.f32 %v678, 0.0
        %s817 = scalar_lea.vmem [#allocation7], 128
        %v818 = vld [vmem:[%s817] sm:$0xff]
        %v819 = vld [vmem:[%s817 + $0x8] sm:$0xff]
        %v820 = vld [vmem:[%s817 + $0x10] sm:$0xff]
        %v821 = vld [vmem:[%s817 + $0x18] sm:$0xff]
        %v822 = vld [vmem:[%s817 + $0x20] sm:$0xff]
        %v823 = vld [vmem:[%s817 + $0x28] sm:$0xff]
        %v824 = vld [vmem:[%s817 + $0x30] sm:$0xff]
        %v825 = vld [vmem:[%s817 + $0x38] sm:$0xff]
        %v826 = vld [vmem:[%s817 + $0x40] sm:$0xff]
        %v827 = vld [vmem:[%s817 + $0x48] sm:$0xff]
        %v828 = vld [vmem:[%s817 + $0x50] sm:$0xff]
        %v829 = vld [vmem:[%s817 + $0x58] sm:$0xff]
        %v830 = vld [vmem:[%s817 + $0x60] sm:$0xff]
        %v831 = vld [vmem:[%s817 + $0x68] sm:$0xff]
        %v832 = vld [vmem:[%s817 + $0x70] sm:$0xff]
        %v833 = vld [vmem:[%s817 + $0x78] sm:$0xff]
        %v834 = vlaneseq
        %v835 = vshrl.u32 %v834, 7
        %v836 = vsub.s32 1, %v835
        %v837 = vrot.slane %v272, %v836
        %838 = vmatprep.subr.mxu0 0.0
        %839 = vmatpush1.msra.mxu0 %v818
        %840 = vmatprep.subr.mxu0 0.0
        %841 = vmatpush1.msra.mxu0 %v819
        %842 = vmatprep.subr.mxu0 0.0
        %843 = vmatpush1.msra.mxu0 %v820
        %844 = vmatprep.subr.mxu0 0.0
        %845 = vmatpush1.msra.mxu0 %v821
        %846 = vmatprep.subr.mxu0 0.0
        %847 = vmatpush1.msra.mxu0 %v822
        %848 = vmatprep.subr.mxu0 0.0
        %849 = vmatpush1.msra.mxu0 %v823
        %850 = vmatprep.subr.mxu0 0.0
        %851 = vmatpush1.msra.mxu0 %v824
        %852 = vmatprep.subr.mxu0 0.0
        %853 = vmatpush1.msra.mxu0 %v825
        %854 = vmatprep.subr.mxu0 0.0
        %855 = vmatpush1.msra.mxu0 %v826
        %856 = vmatprep.subr.mxu0 0.0
        %857 = vmatpush1.msra.mxu0 %v827
        %858 = vmatprep.subr.mxu0 0.0
        %859 = vmatpush1.msra.mxu0 %v828
        %860 = vmatprep.subr.mxu0 0.0
        %861 = vmatpush1.msra.mxu0 %v829
        %862 = vmatprep.subr.mxu0 0.0
        %863 = vmatpush1.msra.mxu0 %v830
        %864 = vmatprep.subr.mxu0 0.0
        %865 = vmatpush1.msra.mxu0 %v831
        %866 = vmatprep.subr.mxu0 0.0
        %867 = vmatpush1.msra.mxu0 %v832
        %868 = vmatprep.subr.mxu0 0.0
        %869 = vmatpush1.msra.mxu0 %v833
        %870 = vmatprep.subr.mxu0 0.0
        %871 = vmatpush1.msra.mxu0 0.0
        %872 = vmatprep.subr.mxu0 0.0
        %873 = vmatpush1.msra.mxu0 0.0
        %874 = vmatprep.subr.mxu0 0.0
        %875 = vmatpush1.msra.mxu0 0.0
        %876 = vmatprep.subr.mxu0 0.0
        %877 = vmatpush1.msra.mxu0 0.0
        %878 = vmatprep.subr.mxu0 0.0
        %879 = vmatpush1.msra.mxu0 0.0
        %880 = vmatprep.subr.mxu0 0.0
        %881 = vmatpush1.msra.mxu0 0.0
        %882 = vmatprep.subr.mxu0 0.0
        %883 = vmatpush1.msra.mxu0 0.0
        %884 = vmatprep.subr.mxu0 0.0
        %885 = vmatpush1.msra.mxu0 0.0
        %886 = vmatprep.subr.mxu0 0.0
        %887 = vmatpush1.msra.mxu0 0.0
        %888 = vmatprep.subr.mxu0 0.0
        %889 = vmatpush1.msra.mxu0 0.0
        %890 = vmatprep.subr.mxu0 0.0
        %891 = vmatpush1.msra.mxu0 0.0
        %892 = vmatprep.subr.mxu0 0.0
        %893 = vmatpush1.msra.mxu0 0.0
        %894 = vmatprep.subr.mxu0 0.0
        %895 = vmatpush1.msra.mxu0 0.0
        %896 = vmatprep.subr.mxu0 0.0
        %897 = vmatpush1.msra.mxu0 0.0
        %898 = vmatprep.subr.mxu0 0.0
        %899 = vmatpush1.msra.mxu0 0.0
        %900 = vmatprep.subr.mxu0 0.0
        %901 = vmatpush1.msra.mxu0 0.0
        %902 = vmatprep.mubr.f32.mxu0 0.0
        %903 = vmatmul.mubr.f32.gmra.mrb[0].mxu0 %v785
        %v904 = vpop.f32.mrb[0].mxu0
        %v905 = vadd.f32 %v837, %v904
        %v906 = vpop.f32.mrb[0].mxu0
        %907 = vmatprep.mubr.f32.mxu0 0.0
        %908 = vmatmul.mubr.f32.gmra.mrb[0].mxu0 %v786
        %v909 = vpop.f32.mrb[0].mxu0
        %v910 = vadd.f32 %v837, %v909
        %v911 = vpop.f32.mrb[0].mxu0
        %912 = vmatprep.mubr.f32.mxu0 0.0
        %913 = vmatmul.mubr.f32.gmra.mrb[0].mxu0 %v787
        %v914 = vpop.f32.mrb[0].mxu0
        %v915 = vadd.f32 %v837, %v914
        %v916 = vpop.f32.mrb[0].mxu0
        %917 = vmatprep.mubr.f32.mxu0 0.0
        %918 = vmatmul.mubr.f32.gmra.mrb[0].mxu0 %v788
        %v919 = vpop.f32.mrb[0].mxu0
        %v920 = vadd.f32 %v837, %v919
        %v921 = vpop.f32.mrb[0].mxu0
        %922 = vmatprep.mubr.f32.mxu0 0.0
        %923 = vmatmul.mubr.f32.gmra.mrb[0].mxu0 %v789
        %v924 = vpop.f32.mrb[0].mxu0
        %v925 = vadd.f32 %v837, %v924
        %v926 = vpop.f32.mrb[0].mxu0
        %927 = vmatprep.mubr.f32.mxu0 0.0
        %928 = vmatmul.mubr.f32.gmra.mrb[0].mxu0 %v790
        %v929 = vpop.f32.mrb[0].mxu0
        %v930 = vadd.f32 %v837, %v929
        %v931 = vpop.f32.mrb[0].mxu0
        %932 = vmatprep.mubr.f32.mxu0 0.0
        %933 = vmatmul.mubr.f32.gmra.mrb[0].mxu0 %v791
        %v934 = vpop.f32.mrb[0].mxu0
        %v935 = vadd.f32 %v837, %v934
        %v936 = vpop.f32.mrb[0].mxu0
        %937 = vmatprep.mubr.f32.mxu0 0.0
        %938 = vmatmul.mubr.f32.gmra.mrb[0].mxu0 %v792
        %v939 = vpop.f32.mrb[0].mxu0
        %v940 = vadd.f32 %v837, %v939
        %v941 = vpop.f32.mrb[0].mxu0
        %942 = vmatprep.mubr.f32.mxu0 0.0
        %943 = vmatmul.mubr.f32.gmra.mrb[0].mxu0 %v793
        %v944 = vpop.f32.mrb[0].mxu0
        %v945 = vadd.f32 %v837, %v944
        %v946 = vpop.f32.mrb[0].mxu0
        %947 = vmatprep.mubr.f32.mxu0 0.0
        %948 = vmatmul.mubr.f32.gmra.mrb[0].mxu0 %v794
        %v949 = vpop.f32.mrb[0].mxu0
        %v950 = vadd.f32 %v837, %v949
        %v951 = vpop.f32.mrb[0].mxu0
        %952 = vmatprep.mubr.f32.mxu0 0.0
        %953 = vmatmul.mubr.f32.gmra.mrb[0].mxu0 %v795
        %v954 = vpop.f32.mrb[0].mxu0
        %v955 = vadd.f32 %v837, %v954
        %v956 = vpop.f32.mrb[0].mxu0
        %957 = vmatprep.mubr.f32.mxu0 0.0
        %958 = vmatmul.mubr.f32.gmra.mrb[0].mxu0 %v796
        %v959 = vpop.f32.mrb[0].mxu0
        %v960 = vadd.f32 %v837, %v959
        %v961 = vpop.f32.mrb[0].mxu0
        %962 = vmatprep.mubr.f32.mxu0 0.0
        %963 = vmatmul.mubr.f32.gmra.mrb[0].mxu0 %v797
        %v964 = vpop.f32.mrb[0].mxu0
        %v965 = vadd.f32 %v837, %v964
        %v966 = vpop.f32.mrb[0].mxu0
        %967 = vmatprep.mubr.f32.mxu0 0.0
        %968 = vmatmul.mubr.f32.gmra.mrb[0].mxu0 %v798
        %v969 = vpop.f32.mrb[0].mxu0
        %v970 = vadd.f32 %v837, %v969
        %v971 = vpop.f32.mrb[0].mxu0
        %972 = vmatprep.mubr.f32.mxu0 0.0
        %973 = vmatmul.mubr.f32.gmra.mrb[0].mxu0 %v799
        %v974 = vpop.f32.mrb[0].mxu0
        %v975 = vadd.f32 %v837, %v974
        %v976 = vpop.f32.mrb[0].mxu0
        %977 = vmatprep.mubr.f32.mxu0 0.0
        %978 = vmatmul.mubr.f32.gmra.mrb[0].mxu0 %v800
        %v979 = vpop.f32.mrb[0].mxu0
        %v980 = vadd.f32 %v837, %v979
        %v981 = vpop.f32.mrb[0].mxu0
        %982 = vmatprep.mubr.f32.mxu0 0.0
        %983 = vmatmul.mubr.f32.gmra.mrb[0].mxu0 %v801
        %v984 = vpop.f32.mrb[0].mxu0
        %v985 = vadd.f32 %v837, %v984
        %v986 = vpop.f32.mrb[0].mxu0
        %987 = vmatprep.mubr.f32.mxu0 0.0
        %988 = vmatmul.mubr.f32.gmra.mrb[0].mxu0 %v802
        %v989 = vpop.f32.mrb[0].mxu0
        %v990 = vadd.f32 %v837, %v989
        %v991 = vpop.f32.mrb[0].mxu0
        %992 = vmatprep.mubr.f32.mxu0 0.0
        %993 = vmatmul.mubr.f32.gmra.mrb[0].mxu0 %v803
        %v994 = vpop.f32.mrb[0].mxu0
        %v995 = vadd.f32 %v837, %v994
        %v996 = vpop.f32.mrb[0].mxu0
        %997 = vmatprep.mubr.f32.mxu0 0.0
        %998 = vmatmul.mubr.f32.gmra.mrb[0].mxu0 %v804
        %v999 = vpop.f32.mrb[0].mxu0
        %v1000 = vadd.f32 %v837, %v999
        %v1001 = vpop.f32.mrb[0].mxu0
        %1002 = vmatprep.mubr.f32.mxu0 0.0
        %1003 = vmatmul.mubr.f32.gmra.mrb[0].mxu0 %v805
        %v1004 = vpop.f32.mrb[0].mxu0
        %v1005 = vadd.f32 %v837, %v1004
        %v1006 = vpop.f32.mrb[0].mxu0
        %1007 = vmatprep.mubr.f32.mxu0 0.0
        %1008 = vmatmul.mubr.f32.gmra.mrb[0].mxu0 %v806
        %v1009 = vpop.f32.mrb[0].mxu0
        %v1010 = vadd.f32 %v837, %v1009
        %v1011 = vpop.f32.mrb[0].mxu0
        %1012 = vmatprep.mubr.f32.mxu0 0.0
        %1013 = vmatmul.mubr.f32.gmra.mrb[0].mxu0 %v807
        %v1014 = vpop.f32.mrb[0].mxu0
        %v1015 = vadd.f32 %v837, %v1014
        %v1016 = vpop.f32.mrb[0].mxu0
        %1017 = vmatprep.mubr.f32.mxu0 0.0
        %1018 = vmatmul.mubr.f32.gmra.mrb[0].mxu0 %v808
        %v1019 = vpop.f32.mrb[0].mxu0
        %v1020 = vadd.f32 %v837, %v1019
        %v1021 = vpop.f32.mrb[0].mxu0
        %1022 = vmatprep.mubr.f32.mxu0 0.0
        %1023 = vmatmul.mubr.f32.gmra.mrb[0].mxu0 %v809
        %v1024 = vpop.f32.mrb[0].mxu0
        %v1025 = vadd.f32 %v837, %v1024
        %v1026 = vpop.f32.mrb[0].mxu0
        %1027 = vmatprep.mubr.f32.mxu0 0.0
        %1028 = vmatmul.mubr.f32.gmra.mrb[0].mxu0 %v810
        %v1029 = vpop.f32.mrb[0].mxu0
        %v1030 = vadd.f32 %v837, %v1029
        %v1031 = vpop.f32.mrb[0].mxu0
        %1032 = vmatprep.mubr.f32.mxu0 0.0
        %1033 = vmatmul.mubr.f32.gmra.mrb[0].mxu0 %v811
        %v1034 = vpop.f32.mrb[0].mxu0
        %v1035 = vadd.f32 %v837, %v1034
        %v1036 = vpop.f32.mrb[0].mxu0
        %1037 = vmatprep.mubr.f32.mxu0 0.0
        %1038 = vmatmul.mubr.f32.gmra.mrb[0].mxu0 %v812
        %v1039 = vpop.f32.mrb[0].mxu0
        %v1040 = vadd.f32 %v837, %v1039
        %v1041 = vpop.f32.mrb[0].mxu0
        %1042 = vmatprep.mubr.f32.mxu0 0.0
        %1043 = vmatmul.mubr.f32.gmra.mrb[0].mxu0 %v813
        %v1044 = vpop.f32.mrb[0].mxu0
        %v1045 = vadd.f32 %v837, %v1044
        %v1046 = vpop.f32.mrb[0].mxu0
        %1047 = vmatprep.mubr.f32.mxu0 0.0
        %1048 = vmatmul.mubr.f32.gmra.mrb[0].mxu0 %v814
        %v1049 = vpop.f32.mrb[0].mxu0
        %v1050 = vadd.f32 %v837, %v1049
        %v1051 = vpop.f32.mrb[0].mxu0
        %1052 = vmatprep.mubr.f32.mxu0 0.0
        %1053 = vmatmul.mubr.f32.gmra.mrb[0].mxu0 %v815
        %v1054 = vpop.f32.mrb[0].mxu0
        %v1055 = vadd.f32 %v837, %v1054
        %v1056 = vpop.f32.mrb[0].mxu0
        %1057 = vmatprep.mubr.f32.mxu0 0.0
        %1058 = vmatmul.mubr.f32.gmra.mrb[0].mxu0 %v816
        %v1059 = vpop.f32.mrb[0].mxu0
        %v1060 = vadd.f32 %v837, %v1059
        %v1061 = vpop.f32.mrb[0].mxu0
        %1062 = vdwg.mxu0
        %v1063 = vand.u32 2147483647, %v905
        %v1064 = vand.u32 2147483647, %v910
        %v1065 = vand.u32 2147483647, %v915
        %v1066 = vand.u32 2147483647, %v920
        %v1067 = vand.u32 2147483647, %v925
        %v1068 = vand.u32 2147483647, %v930
        %v1069 = vand.u32 2147483647, %v935
        %v1070 = vand.u32 2147483647, %v940
        %v1071 = vand.u32 2147483647, %v945
        %v1072 = vand.u32 2147483647, %v950
        %v1073 = vand.u32 2147483647, %v955
        %v1074 = vand.u32 2147483647, %v960
        %v1075 = vand.u32 2147483647, %v965
        %v1076 = vand.u32 2147483647, %v970
        %v1077 = vand.u32 2147483647, %v975
        %v1078 = vand.u32 2147483647, %v980
        %v1079 = vand.u32 2147483647, %v985
        %v1080 = vand.u32 2147483647, %v990
        %v1081 = vand.u32 2147483647, %v995
        %v1082 = vand.u32 2147483647, %v1000
        %v1083 = vand.u32 2147483647, %v1005
        %v1084 = vand.u32 2147483647, %v1010
        %v1085 = vand.u32 2147483647, %v1015
        %v1086 = vand.u32 2147483647, %v1020
        %v1087 = vand.u32 2147483647, %v1025
        %v1088 = vand.u32 2147483647, %v1030
        %v1089 = vand.u32 2147483647, %v1035
        %v1090 = vand.u32 2147483647, %v1040
        %v1091 = vand.u32 2147483647, %v1045
        %v1092 = vand.u32 2147483647, %v1050
        %v1093 = vand.u32 2147483647, %v1055
        %v1094 = vand.u32 2147483647, %v1060
        %v1095 = vmul.f32 %v1063, %v404
        %v1096 = vmul.f32 %v1064, %v405
        %v1097 = vmul.f32 %v1065, %v406
        %v1098 = vmul.f32 %v1066, %v407
        %v1099 = vmul.f32 %v1067, %v408
        %v1100 = vmul.f32 %v1068, %v409
        %v1101 = vmul.f32 %v1069, %v410
        %v1102 = vmul.f32 %v1070, %v411
        %v1103 = vmul.f32 %v1071, %v412
        %v1104 = vmul.f32 %v1072, %v413
        %v1105 = vmul.f32 %v1073, %v414
        %v1106 = vmul.f32 %v1074, %v415
        %v1107 = vmul.f32 %v1075, %v416
        %v1108 = vmul.f32 %v1076, %v417
        %v1109 = vmul.f32 %v1077, %v418
        %v1110 = vmul.f32 %v1078, %v419
        %v1111 = vmul.f32 %v1079, %v420
        %v1112 = vmul.f32 %v1080, %v421
        %v1113 = vmul.f32 %v1081, %v422
        %v1114 = vmul.f32 %v1082, %v423
        %v1115 = vmul.f32 %v1083, %v424
        %v1116 = vmul.f32 %v1084, %v425
        %v1117 = vmul.f32 %v1085, %v426
        %v1118 = vmul.f32 %v1086, %v427
        %v1119 = vmul.f32 %v1087, %v428
        %v1120 = vmul.f32 %v1088, %v429
        %v1121 = vmul.f32 %v1089, %v430
        %v1122 = vmul.f32 %v1090, %v431
        %v1123 = vmul.f32 %v1091, %v432
        %v1124 = vmul.f32 %v1092, %v433
        %v1125 = vmul.f32 %v1093, %v434
        %v1126 = vmul.f32 %v1094, %v435
        %v1127 = vadd.f32 %v1095, %v1096
        %v1128 = vadd.f32 %v1127, %v1097
        %v1129 = vadd.f32 %v1128, %v1098
        %v1130 = vadd.f32 %v1129, %v1099
        %v1131 = vadd.f32 %v1130, %v1100
        %v1132 = vadd.f32 %v1131, %v1101
        %v1133 = vadd.f32 %v1132, %v1102
        %v1134 = vadd.f32 %v1133, %v1103
        %v1135 = vadd.f32 %v1134, %v1104
        %v1136 = vadd.f32 %v1135, %v1105
        %v1137 = vadd.f32 %v1136, %v1106
        %v1138 = vadd.f32 %v1137, %v1107
        %v1139 = vadd.f32 %v1138, %v1108
        %v1140 = vadd.f32 %v1139, %v1109
        %v1141 = vadd.f32 %v1140, %v1110
        %v1142 = vadd.f32 %v1141, %v1111
        %v1143 = vadd.f32 %v1142, %v1112
        %v1144 = vadd.f32 %v1143, %v1113
        %v1145 = vadd.f32 %v1144, %v1114
        %v1146 = vadd.f32 %v1145, %v1115
        %v1147 = vadd.f32 %v1146, %v1116
        %v1148 = vadd.f32 %v1147, %v1117
        %v1149 = vadd.f32 %v1148, %v1118
        %v1150 = vadd.f32 %v1149, %v1119
        %v1151 = vadd.f32 %v1150, %v1120
        %v1152 = vadd.f32 %v1151, %v1121
        %v1153 = vadd.f32 %v1152, %v1122
        %v1154 = vadd.f32 %v1153, %v1123
        %v1155 = vadd.f32 %v1154, %v1124
        %v1156 = vadd.f32 %v1155, %v1125
        %v1157 = vadd.f32 %v1156, %v1126
        %1158 = vadd.xlane.f32.xlu0 %v1157
        %v1159 = vpop.xlane.xlu0 %1158
        %v1160 = vrot.slane %v1159, 4
        %v1161 = vadd.f32 %v1159, %v1160
        %v1162 = vrot.slane %v1161, 2
        %v1163 = vadd.f32 %v1161, %v1162
        %v1164 = vrot.slane %v1163, 1
        %v1165 = vadd.f32 %v1163, %v1164
        %s1166 = vtos %v1165
        %v1167 = vmax.f32 %v905, 0.0
        %v1168 = vmax.f32 %v910, 0.0
        %v1169 = vmax.f32 %v915, 0.0
        %v1170 = vmax.f32 %v920, 0.0
        %v1171 = vmax.f32 %v925, 0.0
        %v1172 = vmax.f32 %v930, 0.0
        %v1173 = vmax.f32 %v935, 0.0
        %v1174 = vmax.f32 %v940, 0.0
        %v1175 = vmax.f32 %v945, 0.0
        %v1176 = vmax.f32 %v950, 0.0
        %v1177 = vmax.f32 %v955, 0.0
        %v1178 = vmax.f32 %v960, 0.0
        %v1179 = vmax.f32 %v965, 0.0
        %v1180 = vmax.f32 %v970, 0.0
        %v1181 = vmax.f32 %v975, 0.0
        %v1182 = vmax.f32 %v980, 0.0
        %v1183 = vmax.f32 %v985, 0.0
        %v1184 = vmax.f32 %v990, 0.0
        %v1185 = vmax.f32 %v995, 0.0
        %v1186 = vmax.f32 %v1000, 0.0
        %v1187 = vmax.f32 %v1005, 0.0
        %v1188 = vmax.f32 %v1010, 0.0
        %v1189 = vmax.f32 %v1015, 0.0
        %v1190 = vmax.f32 %v1020, 0.0
        %v1191 = vmax.f32 %v1025, 0.0
        %v1192 = vmax.f32 %v1030, 0.0
        %v1193 = vmax.f32 %v1035, 0.0
        %v1194 = vmax.f32 %v1040, 0.0
        %v1195 = vmax.f32 %v1045, 0.0
        %v1196 = vmax.f32 %v1050, 0.0
        %v1197 = vmax.f32 %v1055, 0.0
        %v1198 = vmax.f32 %v1060, 0.0
        %s1199 = scalar_lea.vmem [#allocation7], 256
        %v1200 = vld [vmem:[%s1199] sm:$0xff]
        %v1201 = vld [vmem:[%s1199 + $0x8] sm:$0xff]
        %v1202 = vld [vmem:[%s1199 + $0x10] sm:$0xff]
        %v1203 = vld [vmem:[%s1199 + $0x18] sm:$0xff]
        %v1204 = vld [vmem:[%s1199 + $0x20] sm:$0xff]
        %v1205 = vld [vmem:[%s1199 + $0x28] sm:$0xff]
        %v1206 = vld [vmem:[%s1199 + $0x30] sm:$0xff]
        %v1207 = vld [vmem:[%s1199 + $0x38] sm:$0xff]
        %v1208 = vld [vmem:[%s1199 + $0x40] sm:$0xff]
        %v1209 = vld [vmem:[%s1199 + $0x48] sm:$0xff]
        %v1210 = vld [vmem:[%s1199 + $0x50] sm:$0xff]
        %v1211 = vld [vmem:[%s1199 + $0x58] sm:$0xff]
        %v1212 = vld [vmem:[%s1199 + $0x60] sm:$0xff]
        %v1213 = vld [vmem:[%s1199 + $0x68] sm:$0xff]
        %v1214 = vld [vmem:[%s1199 + $0x70] sm:$0xff]
        %v1215 = vld [vmem:[%s1199 + $0x78] sm:$0xff]
        %v1216 = vlaneseq
        %v1217 = vshrl.u32 %v1216, 7
        %v1218 = vsub.s32 2, %v1217
        %v1219 = vrot.slane %v272, %v1218
        %1220 = vmatprep.subr.mxu0 0.0
        %1221 = vmatpush1.msra.mxu0 %v1200
        %1222 = vmatprep.subr.mxu0 0.0
        %1223 = vmatpush1.msra.mxu0 %v1201
        %1224 = vmatprep.subr.mxu0 0.0
        %1225 = vmatpush1.msra.mxu0 %v1202
        %1226 = vmatprep.subr.mxu0 0.0
        %1227 = vmatpush1.msra.mxu0 %v1203
        %1228 = vmatprep.subr.mxu0 0.0
        %1229 = vmatpush1.msra.mxu0 %v1204
        %1230 = vmatprep.subr.mxu0 0.0
        %1231 = vmatpush1.msra.mxu0 %v1205
        %1232 = vmatprep.subr.mxu0 0.0
        %1233 = vmatpush1.msra.mxu0 %v1206
        %1234 = vmatprep.subr.mxu0 0.0
        %1235 = vmatpush1.msra.mxu0 %v1207
        %1236 = vmatprep.subr.mxu0 0.0
        %1237 = vmatpush1.msra.mxu0 %v1208
        %1238 = vmatprep.subr.mxu0 0.0
        %1239 = vmatpush1.msra.mxu0 %v1209
        %1240 = vmatprep.subr.mxu0 0.0
        %1241 = vmatpush1.msra.mxu0 %v1210
        %1242 = vmatprep.subr.mxu0 0.0
        %1243 = vmatpush1.msra.mxu0 %v1211
        %1244 = vmatprep.subr.mxu0 0.0
        %1245 = vmatpush1.msra.mxu0 %v1212
        %1246 = vmatprep.subr.mxu0 0.0
        %1247 = vmatpush1.msra.mxu0 %v1213
        %1248 = vmatprep.subr.mxu0 0.0
        %1249 = vmatpush1.msra.mxu0 %v1214
        %1250 = vmatprep.subr.mxu0 0.0
        %1251 = vmatpush1.msra.mxu0 %v1215
        %1252 = vmatprep.subr.mxu0 0.0
        %1253 = vmatpush1.msra.mxu0 0.0
        %1254 = vmatprep.subr.mxu0 0.0
        %1255 = vmatpush1.msra.mxu0 0.0
        %1256 = vmatprep.subr.mxu0 0.0
        %1257 = vmatpush1.msra.mxu0 0.0
        %1258 = vmatprep.subr.mxu0 0.0
        %1259 = vmatpush1.msra.mxu0 0.0
        %1260 = vmatprep.subr.mxu0 0.0
        %1261 = vmatpush1.msra.mxu0 0.0
        %1262 = vmatprep.subr.mxu0 0.0
        %1263 = vmatpush1.msra.mxu0 0.0
        %1264 = vmatprep.subr.mxu0 0.0
        %1265 = vmatpush1.msra.mxu0 0.0
        %1266 = vmatprep.subr.mxu0 0.0
        %1267 = vmatpush1.msra.mxu0 0.0
        %1268 = vmatprep.subr.mxu0 0.0
        %1269 = vmatpush1.msra.mxu0 0.0
        %1270 = vmatprep.subr.mxu0 0.0
        %1271 = vmatpush1.msra.mxu0 0.0
        %1272 = vmatprep.subr.mxu0 0.0
        %1273 = vmatpush1.msra.mxu0 0.0
        %1274 = vmatprep.subr.mxu0 0.0
        %1275 = vmatpush1.msra.mxu0 0.0
        %1276 = vmatprep.subr.mxu0 0.0
        %1277 = vmatpush1.msra.mxu0 0.0
        %1278 = vmatprep.subr.mxu0 0.0
        %1279 = vmatpush1.msra.mxu0 0.0
        %1280 = vmatprep.subr.mxu0 0.0
        %1281 = vmatpush1.msra.mxu0 0.0
        %1282 = vmatprep.subr.mxu0 0.0
        %1283 = vmatpush1.msra.mxu0 0.0
        %1284 = vmatprep.mubr.f32.mxu0 0.0
        %1285 = vmatmul.mubr.f32.gmra.mrb[0].mxu0 %v1167
        %v1286 = vpop.f32.mrb[0].mxu0
        %v1287 = vadd.f32 %v1219, %v1286
        %v1288 = vpop.f32.mrb[0].mxu0
        %1289 = vmatprep.mubr.f32.mxu0 0.0
        %1290 = vmatmul.mubr.f32.gmra.mrb[0].mxu0 %v1168
        %v1291 = vpop.f32.mrb[0].mxu0
        %v1292 = vadd.f32 %v1219, %v1291
        %v1293 = vpop.f32.mrb[0].mxu0
        %1294 = vmatprep.mubr.f32.mxu0 0.0
        %1295 = vmatmul.mubr.f32.gmra.mrb[0].mxu0 %v1169
        %v1296 = vpop.f32.mrb[0].mxu0
        %v1297 = vadd.f32 %v1219, %v1296
        %v1298 = vpop.f32.mrb[0].mxu0
        %1299 = vmatprep.mubr.f32.mxu0 0.0
        %1300 = vmatmul.mubr.f32.gmra.mrb[0].mxu0 %v1170
        %v1301 = vpop.f32.mrb[0].mxu0
        %v1302 = vadd.f32 %v1219, %v1301
        %v1303 = vpop.f32.mrb[0].mxu0
        %1304 = vmatprep.mubr.f32.mxu0 0.0
        %1305 = vmatmul.mubr.f32.gmra.mrb[0].mxu0 %v1171
        %v1306 = vpop.f32.mrb[0].mxu0
        %v1307 = vadd.f32 %v1219, %v1306
        %v1308 = vpop.f32.mrb[0].mxu0
        %1309 = vmatprep.mubr.f32.mxu0 0.0
        %1310 = vmatmul.mubr.f32.gmra.mrb[0].mxu0 %v1172
        %v1311 = vpop.f32.mrb[0].mxu0
        %v1312 = vadd.f32 %v1219, %v1311
        %v1313 = vpop.f32.mrb[0].mxu0
        %1314 = vmatprep.mubr.f32.mxu0 0.0
        %1315 = vmatmul.mubr.f32.gmra.mrb[0].mxu0 %v1173
        %v1316 = vpop.f32.mrb[0].mxu0
        %v1317 = vadd.f32 %v1219, %v1316
        %v1318 = vpop.f32.mrb[0].mxu0
        %1319 = vmatprep.mubr.f32.mxu0 0.0
        %1320 = vmatmul.mubr.f32.gmra.mrb[0].mxu0 %v1174
        %v1321 = vpop.f32.mrb[0].mxu0
        %v1322 = vadd.f32 %v1219, %v1321
        %v1323 = vpop.f32.mrb[0].mxu0
        %1324 = vmatprep.mubr.f32.mxu0 0.0
        %1325 = vmatmul.mubr.f32.gmra.mrb[0].mxu0 %v1175
        %v1326 = vpop.f32.mrb[0].mxu0
        %v1327 = vadd.f32 %v1219, %v1326
        %v1328 = vpop.f32.mrb[0].mxu0
        %1329 = vmatprep.mubr.f32.mxu0 0.0
        %1330 = vmatmul.mubr.f32.gmra.mrb[0].mxu0 %v1176
        %v1331 = vpop.f32.mrb[0].mxu0
        %v1332 = vadd.f32 %v1219, %v1331
        %v1333 = vpop.f32.mrb[0].mxu0
        %1334 = vmatprep.mubr.f32.mxu0 0.0
        %1335 = vmatmul.mubr.f32.gmra.mrb[0].mxu0 %v1177
        %v1336 = vpop.f32.mrb[0].mxu0
        %v1337 = vadd.f32 %v1219, %v1336
        %v1338 = vpop.f32.mrb[0].mxu0
        %1339 = vmatprep.mubr.f32.mxu0 0.0
        %1340 = vmatmul.mubr.f32.gmra.mrb[0].mxu0 %v1178
        %v1341 = vpop.f32.mrb[0].mxu0
        %v1342 = vadd.f32 %v1219, %v1341
        %v1343 = vpop.f32.mrb[0].mxu0
        %1344 = vmatprep.mubr.f32.mxu0 0.0
        %1345 = vmatmul.mubr.f32.gmra.mrb[0].mxu0 %v1179
        %v1346 = vpop.f32.mrb[0].mxu0
        %v1347 = vadd.f32 %v1219, %v1346
        %v1348 = vpop.f32.mrb[0].mxu0
        %1349 = vmatprep.mubr.f32.mxu0 0.0
        %1350 = vmatmul.mubr.f32.gmra.mrb[0].mxu0 %v1180
        %v1351 = vpop.f32.mrb[0].mxu0
        %v1352 = vadd.f32 %v1219, %v1351
        %v1353 = vpop.f32.mrb[0].mxu0
        %1354 = vmatprep.mubr.f32.mxu0 0.0
        %1355 = vmatmul.mubr.f32.gmra.mrb[0].mxu0 %v1181
        %v1356 = vpop.f32.mrb[0].mxu0
        %v1357 = vadd.f32 %v1219, %v1356
        %v1358 = vpop.f32.mrb[0].mxu0
        %1359 = vmatprep.mubr.f32.mxu0 0.0
        %1360 = vmatmul.mubr.f32.gmra.mrb[0].mxu0 %v1182
        %v1361 = vpop.f32.mrb[0].mxu0
        %v1362 = vadd.f32 %v1219, %v1361
        %v1363 = vpop.f32.mrb[0].mxu0
        %1364 = vmatprep.mubr.f32.mxu0 0.0
        %1365 = vmatmul.mubr.f32.gmra.mrb[0].mxu0 %v1183
        %v1366 = vpop.f32.mrb[0].mxu0
        %v1367 = vadd.f32 %v1219, %v1366
        %v1368 = vpop.f32.mrb[0].mxu0
        %1369 = vmatprep.mubr.f32.mxu0 0.0
        %1370 = vmatmul.mubr.f32.gmra.mrb[0].mxu0 %v1184
        %v1371 = vpop.f32.mrb[0].mxu0
        %v1372 = vadd.f32 %v1219, %v1371
        %v1373 = vpop.f32.mrb[0].mxu0
        %1374 = vmatprep.mubr.f32.mxu0 0.0
        %1375 = vmatmul.mubr.f32.gmra.mrb[0].mxu0 %v1185
        %v1376 = vpop.f32.mrb[0].mxu0
        %v1377 = vadd.f32 %v1219, %v1376
        %v1378 = vpop.f32.mrb[0].mxu0
        %1379 = vmatprep.mubr.f32.mxu0 0.0
        %1380 = vmatmul.mubr.f32.gmra.mrb[0].mxu0 %v1186
        %v1381 = vpop.f32.mrb[0].mxu0
        %v1382 = vadd.f32 %v1219, %v1381
        %v1383 = vpop.f32.mrb[0].mxu0
        %1384 = vmatprep.mubr.f32.mxu0 0.0
        %1385 = vmatmul.mubr.f32.gmra.mrb[0].mxu0 %v1187
        %v1386 = vpop.f32.mrb[0].mxu0
        %v1387 = vadd.f32 %v1219, %v1386
        %v1388 = vpop.f32.mrb[0].mxu0
        %1389 = vmatprep.mubr.f32.mxu0 0.0
        %1390 = vmatmul.mubr.f32.gmra.mrb[0].mxu0 %v1188
        %v1391 = vpop.f32.mrb[0].mxu0
        %v1392 = vadd.f32 %v1219, %v1391
        %v1393 = vpop.f32.mrb[0].mxu0
        %1394 = vmatprep.mubr.f32.mxu0 0.0
        %1395 = vmatmul.mubr.f32.gmra.mrb[0].mxu0 %v1189
        %v1396 = vpop.f32.mrb[0].mxu0
        %v1397 = vadd.f32 %v1219, %v1396
        %v1398 = vpop.f32.mrb[0].mxu0
        %1399 = vmatprep.mubr.f32.mxu0 0.0
        %1400 = vmatmul.mubr.f32.gmra.mrb[0].mxu0 %v1190
        %v1401 = vpop.f32.mrb[0].mxu0
        %v1402 = vadd.f32 %v1219, %v1401
        %v1403 = vpop.f32.mrb[0].mxu0
        %1404 = vmatprep.mubr.f32.mxu0 0.0
        %1405 = vmatmul.mubr.f32.gmra.mrb[0].mxu0 %v1191
        %v1406 = vpop.f32.mrb[0].mxu0
        %v1407 = vadd.f32 %v1219, %v1406
        %v1408 = vpop.f32.mrb[0].mxu0
        %1409 = vmatprep.mubr.f32.mxu0 0.0
        %1410 = vmatmul.mubr.f32.gmra.mrb[0].mxu0 %v1192
        %v1411 = vpop.f32.mrb[0].mxu0
        %v1412 = vadd.f32 %v1219, %v1411
        %v1413 = vpop.f32.mrb[0].mxu0
        %1414 = vmatprep.mubr.f32.mxu0 0.0
        %1415 = vmatmul.mubr.f32.gmra.mrb[0].mxu0 %v1193
        %v1416 = vpop.f32.mrb[0].mxu0
        %v1417 = vadd.f32 %v1219, %v1416
        %v1418 = vpop.f32.mrb[0].mxu0
        %1419 = vmatprep.mubr.f32.mxu0 0.0
        %1420 = vmatmul.mubr.f32.gmra.mrb[0].mxu0 %v1194
        %v1421 = vpop.f32.mrb[0].mxu0
        %v1422 = vadd.f32 %v1219, %v1421
        %v1423 = vpop.f32.mrb[0].mxu0
        %1424 = vmatprep.mubr.f32.mxu0 0.0
        %1425 = vmatmul.mubr.f32.gmra.mrb[0].mxu0 %v1195
        %v1426 = vpop.f32.mrb[0].mxu0
        %v1427 = vadd.f32 %v1219, %v1426
        %v1428 = vpop.f32.mrb[0].mxu0
        %1429 = vmatprep.mubr.f32.mxu0 0.0
        %1430 = vmatmul.mubr.f32.gmra.mrb[0].mxu0 %v1196
        %v1431 = vpop.f32.mrb[0].mxu0
        %v1432 = vadd.f32 %v1219, %v1431
        %v1433 = vpop.f32.mrb[0].mxu0
        %1434 = vmatprep.mubr.f32.mxu0 0.0
        %1435 = vmatmul.mubr.f32.gmra.mrb[0].mxu0 %v1197
        %v1436 = vpop.f32.mrb[0].mxu0
        %v1437 = vadd.f32 %v1219, %v1436
        %v1438 = vpop.f32.mrb[0].mxu0
        %1439 = vmatprep.mubr.f32.mxu0 0.0
        %1440 = vmatmul.mubr.f32.gmra.mrb[0].mxu0 %v1198
        %v1441 = vpop.f32.mrb[0].mxu0
        %v1442 = vadd.f32 %v1219, %v1441
        %v1443 = vpop.f32.mrb[0].mxu0
        %1444 = vdwg.mxu0
        %1445 = vst [vmem:[%s227] sm:$0xff] %v1287
        %1446 = vst [vmem:[%s227 + $0x8] sm:$0xff] %v1292
        %1447 = vst [vmem:[%s227 + $0x10] sm:$0xff] %v1297
        %1448 = vst [vmem:[%s227 + $0x18] sm:$0xff] %v1302
        %1449 = vst [vmem:[%s227 + $0x20] sm:$0xff] %v1307
        %1450 = vst [vmem:[%s227 + $0x28] sm:$0xff] %v1312
        %1451 = vst [vmem:[%s227 + $0x30] sm:$0xff] %v1317
        %1452 = vst [vmem:[%s227 + $0x38] sm:$0xff] %v1322
        %1453 = vst [vmem:[%s227 + $0x40] sm:$0xff] %v1327
        %1454 = vst [vmem:[%s227 + $0x48] sm:$0xff] %v1332
        %1455 = vst [vmem:[%s227 + $0x50] sm:$0xff] %v1337
        %1456 = vst [vmem:[%s227 + $0x58] sm:$0xff] %v1342
        %1457 = vst [vmem:[%s227 + $0x60] sm:$0xff] %v1347
        %1458 = vst [vmem:[%s227 + $0x68] sm:$0xff] %v1352
        %1459 = vst [vmem:[%s227 + $0x70] sm:$0xff] %v1357
        %1460 = vst [vmem:[%s227 + $0x78] sm:$0xff] %v1362
        %1461 = vst [vmem:[%s227 + $0x80] sm:$0xff] %v1367
        %1462 = vst [vmem:[%s227 + $0x88] sm:$0xff] %v1372
        %1463 = vst [vmem:[%s227 + $0x90] sm:$0xff] %v1377
        %1464 = vst [vmem:[%s227 + $0x98] sm:$0xff] %v1382
        %1465 = vst [vmem:[%s227 + $0xa0] sm:$0xff] %v1387
        %1466 = vst [vmem:[%s227 + $0xa8] sm:$0xff] %v1392
        %1467 = vst [vmem:[%s227 + $0xb0] sm:$0xff] %v1397
        %1468 = vst [vmem:[%s227 + $0xb8] sm:$0xff] %v1402
        %1469 = vst [vmem:[%s227 + $0xc0] sm:$0xff] %v1407
        %1470 = vst [vmem:[%s227 + $0xc8] sm:$0xff] %v1412
        %1471 = vst [vmem:[%s227 + $0xd0] sm:$0xff] %v1417
        %1472 = vst [vmem:[%s227 + $0xd8] sm:$0xff] %v1422
        %1473 = vst [vmem:[%s227 + $0xe0] sm:$0xff] %v1427
        %1474 = vst [vmem:[%s227 + $0xe8] sm:$0xff] %v1432
        %1475 = vst [vmem:[%s227 + $0xf0] sm:$0xff] %v1437
        %1476 = vst [vmem:[%s227 + $0xf8] sm:$0xff] %v1442
        %s1477 = sld [smem:[#allocation2]]
        %s1478 = sadd.f32 %s1477, %s784
        %s1479 = scalar_lea.smem [#allocation2], 0
        %1480 = sst [smem:[%s1479]] %s1478
        %s1481 = sld [smem:[#allocation2 + $0x1]]
        %s1482 = sadd.f32 %s1481, %s1166
        %s1483 = scalar_lea.smem [#allocation2], 1
        %1484 = sst [smem:[%s1483]] %s1482
        %p1485 = scmp.eq.s32.totalorder %s24, 1
        // Predicated region
        $region45: #{tpu_custom_call.1} parent=31 // pred_check
          %p1486 = pneg %p1485
        $region46: #{tpu_custom_call.1} parent=31 // pred_check_branch
          %1488 = sbr.rel (%p1486) target = $region48
        $region47: #{tpu_custom_call.1} parent=31 // pred_region
          %s1489 = sld [smem:[#allocation2]]
          %s1490 = smul.f32 %s1489, 1.5625e-05
          %s1491 = sld [smem:[#allocation2 + $0x1]]
          %s1492 = smul.f32 %s1491, 1.5625e-05
          %s1493 = sadd.f32 %s1490, %s1492
          %s1494 = smul.f32 %s1493, 0.5
          %s1495 = scalar_lea.smem [#allocation10], 0
          %1496 = sst [smem:[%s1495]] %s1494
        $region48: #{tpu_custom_call.1} parent=31 // pred_fallthru
          _
        %s1497 = sand.u32 %s100, 1
        %s1498 = scalar_lea.sflag [#allocation5], %s1497
        %s1499 = sand.u32 %s100, 1
        %s1500 = smul.addr %s1499, 256
        %s1501 = scalar_lea.vmem [#allocation9], %s1500
        // Predicated region
        $region49: #{tpu_custom_call.1} parent=31 // pred_check
          %p1502 = pneg %p110
        $region50: #{tpu_custom_call.1} parent=31 // pred_check_branch
          %1504 = sbr.rel (%p1502) target = $region52
        $region51: #{tpu_custom_call.1} parent=31 // pred_region
          %s1505 = smul.u32 32, %s24
          %s1507 = ssub.s32 4096, 4096
          %1508 = vsyncadd %s1498, %s1507
          %s1509 = smul.addr %s1505, 128
          %s1510 = scalar_lea.hbm %s3, %s1509
          %s1511 = sshll.u32 %s1501, 4
          %s1512 = int_to_ptr.vmem [resolvable:$true] %s1511
          %1517 = dma.vmem_to_hbm [thread:$0]  %s1512, 4096, %s1510, %s1498, 128, 128, 8
        $region52: #{tpu_custom_call.1} parent=31 // pred_fallthru
          _
        // Predicated region
        $region53: #{tpu_custom_call.1} parent=31 // pred_check
          %p1518 = pneg %p131
        $region54: #{tpu_custom_call.1} parent=31 // pred_check_branch
          %1520 = sbr.rel (%p1518) target = $region56
        $region55: #{tpu_custom_call.1} parent=31 // pred_region
          %s1522 = ssub.s32 16, 16
          %1523 = vsyncadd [#allocation6], %s1522
          %1526 = dma.smem_to_hbm [#allocation10], 16, %s4, [#allocation6]
        $region56: #{tpu_custom_call.1} parent=31 // pred_fallthru
          _
        // Predicated region
        $region57: #{tpu_custom_call.1} parent=31 // pred_check
          %p1527 = pneg %p131
        $region58: #{tpu_custom_call.1} parent=31 // pred_check_branch
          %1529 = sbr.rel (%p1527) target = $region60
        $region59: #{tpu_custom_call.1} parent=31 // pred_region
          %1530 = dma.done [#allocation6], 16
        $region60: #{tpu_custom_call.1} parent=31 // pred_fallthru
          _
        %1531 = sfence
      $region32: #{tpu_custom_call.1} parent=5 // pred_fallthru
        _
      %p1532 = scmp.le.s32.totalorder 2, %s19
      // Predicated region
      $region61: #{tpu_custom_call.1} parent=5 // pred_check
        %p1533 = pneg %p1532
      $region62: #{tpu_custom_call.1} parent=5 // pred_check_branch
        %1535 = sbr.rel (%p1533) target = $region64
      $region63: #{tpu_custom_call.1} parent=5 // pred_region
        %s1536 = ssub.s32 %s19, 2
        // Predicated region
        $region65: #{tpu_custom_call.1} parent=63 // pred_check
          %p1537 = pneg %p116
        $region66: #{tpu_custom_call.1} parent=63 // pred_check_branch
          %1539 = sbr.rel (%p1537) target = $region68
        $region67: #{tpu_custom_call.1} parent=63 // pred_region
          %s1540 = sand.u32 %s101, 1
          %s1541 = scalar_lea.sflag [#allocation5], %s1540
          %s1542 = sand.u32 %s101, 1
          %s1543 = smul.addr %s1542, 256
          %s1544 = scalar_lea.vmem [#allocation9], %s1543
          %1545 = dma.done %s1541, 4096
        $region68: #{tpu_custom_call.1} parent=63 // pred_fallthru
          _
      $region64: #{tpu_custom_call.1} parent=5 // pred_fallthru
        _
    $region6: #{tpu_custom_call.1} parent=1 // loop_footer
      %s23 = sadd.s32 1, %s19
    $region7: #{tpu_custom_call.1} parent=1 // loop_footer_branch
      %18 = sbr.rel target = $region3
    $region8: #{tpu_custom_call.1} parent=1 // loop_exit
      _
    %1546 = vsyncpa [#allocation4], 1
    %s1547 = scalar_lea.sflag [#allocation4], 1
    %1548 = vsyncpa %s1547, 1
    %1549 = vsyncpa [#allocation8], 1
    %1550 = vsyncpa [#allocation5], 1
    %s1551 = scalar_lea.sflag [#allocation5], 1
    %1552 = vsyncpa %s1551, 1
    %1553 = vsyncpa [#allocation6], 1
    %s1554 = scalar_lea.sflag [#allocation6], 1
    %1555 = vsyncpa %s1554, 1

</llo_original>
